<compile_context>
chip_gen: v7x
topology: tpu7x:2x2x1
jax: 0.10.0
libtpu: 0.0.40
codegen_flags: <defaults>
</compile_context>

<pallas_src>
import jax
import jax.numpy as jnp
from jax.experimental import pallas as pl
from jax.experimental.pallas import tpu as pltpu

H = W = 28
CIN = 1
COUT = 16
KH = KW = 3
P = H * W                     # 784 spatial positions per image
PPAD = 896                    # 7 * 128: lane-aligned padded spatial dim
FC_IN = COUT * P              # 12544
FC_OUT = 10
OUT_PAD = 128                 # lane-dense padded FC output width


def cnn_fused_kernel(cw_ref, cb_ref, x_ref, msk_ref, fw_ref, fb_ref, o_ref, tap_ref):
    """One batch tile: conv(3x3, pad=1) + ReLU + flatten + FC, entirely in VMEM.

    cw_ref : SMEM (16, 9)           conv weights, tap index t = ky*3 + kx
    cb_ref : SMEM (16,)             conv bias
    x_ref  : VMEM (B, 896)          flat images (p = h*28 + w), zero beyond p=783
    msk_ref: VMEM (9, 896)          per-tap combined validity masks (border + range)
    fw_ref : VMEM (16, 896, 128)    bf16 permuted+padded FC weight: fw[c,p,o]=fc_w[o,c*784+p]
    fb_ref : VMEM (1, 128)          padded FC bias (f32)
    o_ref  : VMEM (B, 128)          padded logits (f32)
    tap_ref: VMEM scratch (9, B, 896) shifted/masked conv taps (f32, exact conv)
    """
    B = o_ref.shape[0]

    # --- im2col: build the 9 taps once per batch tile -------------------------------
    # tap[t, n, p] = image[n, h+ky-1, w+kx-1] (0 outside the 28x28 image).
    # A (dy,dx) offset is a circular lane roll by -(dy*28+dx) (XLU), then one VPU
    # multiply by the precomputed mask (zeroes border-invalid and wrapped positions),
    # then one full-width lane-aligned store.
    for ky in range(KH):
        for kx in range(KW):
            t = ky * KW + kx
            s = (ky - 1) * W + (kx - 1)
            x = x_ref[...]                                             # (B, 896)
            shifted = x if s == 0 else pltpu.roll(x, shift=(-s) % PPAD, axis=1)
            tap_ref[t, :, :] = shifted * msk_ref[pl.ds(t, 1), :]

    # --- conv channel mix + bias + ReLU + FC, accumulated into the VMEM output ------
    o_ref[...] = jnp.broadcast_to(fb_ref[...], (B, OUT_PAD))

    @pl.loop(0, COUT)
    def _(c):
        # 9 scalar-broadcast FMAs on the VPU (exact f32 conv), then ReLU.
        z = cw_ref[c, 0] * tap_ref[0]
        for t in range(1, KH * KW):
            z = z + cw_ref[c, t] * tap_ref[t]
        act = jnp.maximum(z + cb_ref[c], 0.0).astype(jnp.bfloat16)     # (B, 896)
        # bf16 x bf16 -> f32 MXU matmul; fw rows >= 784 are zero, so the padded tail
        # of `act` (= relu(bias)) contributes nothing.  NCHW flatten order is baked
        # into fw, so the (B,16,784) activation never leaves VMEM.
        o_ref[...] += jnp.dot(act, fw_ref[c], preferred_element_type=jnp.float32)


def _pick_block_b(n):
    # Fill the MXU rows while keeping >=2 grid steps for moderate batches
    # (lets "parallel" shard across v7x's two TensorCores); round small batches
    # up to the 8-sublane granule.
    if n >= 1024:
        return 256          # fills the 256-row MXU on v6e/v7x, still many grid steps
    return min(128, max(8, ((n + 7) // 8) * 8))


def _resident_spec(shape, index_map):
    # Grid-constant operands: single-buffer (no point double-buffering a block whose
    # index never changes).  Fall back to the default spec if this JAX version does
    # not expose pipeline_mode.
    try:
        return pl.BlockSpec(shape, index_map, pipeline_mode=pl.Buffered(1))
    except TypeError:
        return pl.BlockSpec(shape, index_map)


@jax.jit
def cnn_forward(x_nchw, conv_w, conv_b, fc_w, fc_b):
    N = x_nchw.shape[0]
    block_b = _pick_block_b(N)
    n_pad = pl.cdiv(N, block_b) * block_b

    # Flat (N, 896) images, zero-padded on batch and spatial dims.
    x_flat = x_nchw.reshape(N, P)
    x_flat = jnp.pad(x_flat, ((0, n_pad - N), (0, PPAD - P)))

    cw = conv_w.reshape(COUT, KH * KW)                        # (16, 9), t = ky*3 + kx
    cb = conv_b                                               # (16,)

    # FC weight permuted so the kernel consumes per-channel (B, 896) activations
    # directly (equivalent to the NCHW flatten); zero-padded K 784->896 and
    # lane-dense out 10->128; stored bf16 (MXU-native, half the resident VMEM).
    fw = fc_w.reshape(FC_OUT, COUT, P).transpose(1, 2, 0)     # (16, 784, 10)
    fw = jnp.pad(fw, ((0, 0), (0, PPAD - P), (0, OUT_PAD - FC_OUT))).astype(jnp.bfloat16)
    fb = jnp.pad(fc_b, (0, OUT_PAD - FC_OUT)).reshape(1, OUT_PAD)

    # Combined per-tap validity masks: zero-padding halo of the 3x3 conv AND the
    # 784->896 spatial padding AND circular-roll wraparound, all folded into one mask.
    pos = jnp.arange(PPAD, dtype=jnp.int32)
    hh, ww = pos // W, pos % W
    in_img = pos < P
    rows = []
    for ky in range(KH):
        for kx in range(KW):
            dy, dx = ky - 1, kx - 1
            ok = (in_img & (hh + dy >= 0) & (hh + dy < H)
                  & (ww + dx >= 0) & (ww + dx < W))
            rows.append(ok)
    tap_mask = jnp.stack(rows, axis=0).astype(jnp.float32)    # (9, 896)

    grid = (n_pad // block_b,)
    out = pl.pallas_call(
        cnn_fused_kernel,
        out_shape=jax.ShapeDtypeStruct((n_pad, OUT_PAD), jnp.float32),
        grid=grid,
        in_specs=[
            pl.BlockSpec(memory_space=pltpu.MemorySpace.SMEM),          # conv weights
            pl.BlockSpec(memory_space=pltpu.MemorySpace.SMEM),          # conv bias
            pl.BlockSpec((block_b, PPAD), lambda i: (i, 0)),            # image batch tile
            _resident_spec((KH * KW, PPAD), lambda i: (0, 0)),          # tap masks
            _resident_spec((COUT, PPAD, OUT_PAD), lambda i: (0, 0, 0)), # FC weight (resident)
            _resident_spec((1, OUT_PAD), lambda i: (0, 0)),             # FC bias
        ],
        out_specs=pl.BlockSpec((block_b, OUT_PAD), lambda i: (i, 0)),
        scratch_shapes=[pltpu.VMEM((KH * KW, block_b, PPAD), jnp.float32)],
        compiler_params=pltpu.CompilerParams(
            dimension_semantics=("parallel",),
            vmem_limit_bytes=48 * 1024 * 1024),
    )(cw, cb, x_flat, tap_mask, fw, fb)

    return out[:N, :FC_OUT]


def reference_forward(x_nchw, conv_w, conv_b, fc_w, fc_b):
    y = jax.lax.conv_general_dilated(
        x_nchw, conv_w, window_strides=(1, 1), padding=((1, 1), (1, 1)),
        dimension_numbers=("NCHW", "OIHW", "NCHW"),
        precision=jax.lax.Precision.HIGHEST)
    y = jnp.maximum(y + conv_b.reshape(1, COUT, 1, 1), 0.0)
    flat = y.reshape(y.shape[0], FC_IN)
    return jnp.dot(flat, fc_w.T, precision=jax.lax.Precision.HIGHEST) + fc_b


if __name__ == "__main__":
    key = jax.random.PRNGKey(0)
    k_x, k_cw, k_cb, k_fw, k_fb = jax.random.split(key, 5)

    # Deterministic parameter init (shapes match nn.Conv2d / nn.Linear).
    conv_w = 0.1 * jax.random.normal(k_cw, (COUT, CIN, KH, KW), dtype=jnp.float32)
    conv_b = 0.1 * jax.random.normal(k_cb, (COUT,), dtype=jnp.float32)
    fc_w = 0.02 * jax.random.normal(k_fw, (FC_OUT, FC_IN), dtype=jnp.float32)
    fc_b = 0.02 * jax.random.normal(k_fb, (FC_OUT,), dtype=jnp.float32)

    # N=2: tiny single-tile path.  N=300: multi-step grid (block 128, 3 steps) with a
    # batch that is not a multiple of the tile, covering the padding/slice path.
    for N in (2, 300):
        x = jax.random.normal(jax.random.fold_in(k_x, N), (N, CIN, H, W), dtype=jnp.float32)
        out = jax.block_until_ready(cnn_forward(x, conv_w, conv_b, fc_w, fc_b))
        ref = reference_forward(x, conv_w, conv_b, fc_w, fc_b)
        assert out.shape == (N, FC_OUT)
        # bf16 MXU path (f32 accumulation) -> slightly looser tolerance than pure f32.
        assert jnp.allclose(out, ref, atol=2e-2, rtol=2e-2), f"mismatch vs reference (N={N})"

    print("KERNEL_OK")
</pallas_src>

<mosaic_0001>
module attributes {stable_mosaic.version = 11 : i64} {
  func.func @cnn_fused_kernel(%arg0: i32, %arg1: memref<16x9xf32, #tpu.memory_space<smem>>, %arg2: memref<16xf32, #tpu.memory_space<smem>>, %arg3: memref<8x896xf32, #tpu.memory_space<vmem>>, %arg4: memref<9x896xf32, #tpu.memory_space<vmem>>, %arg5: memref<16x896x128xbf16, #tpu.memory_space<vmem>>, %arg6: memref<1x128xf32, #tpu.memory_space<vmem>>, %arg7: memref<8x128xf32, #tpu.memory_space<vmem>>, %arg8: memref<9x8x896xf32, #tpu.memory_space<vmem>>) attributes {dimension_semantics = [#tpu.dimension_semantics<parallel>], iteration_bounds = array<i64: 1>, scalar_prefetch = 0 : i64, scratch_operands = 1 : i64, tpu.core_type = #tpu.core_type<tc>, window_params = [{transform_indices = @transform_0, window_bounds = array<i64: 16, 9>}, {transform_indices = @transform_1, window_bounds = array<i64: 16>}, {transform_indices = @transform_2, window_bounds = array<i64: 8, 896>}, {pipeline_mode = #tpu.pipeline_mode<synchronous>, transform_indices = @transform_3, window_bounds = array<i64: 9, 896>}, {pipeline_mode = #tpu.pipeline_mode<synchronous>, transform_indices = @transform_4, window_bounds = array<i64: 16, 896, 128>}, {pipeline_mode = #tpu.pipeline_mode<synchronous>, transform_indices = @transform_5, window_bounds = array<i64: 1, 128>}, {transform_indices = @transform_6, window_bounds = array<i64: 8, 128>}]} {
    %c0 = arith.constant 0 : index
    %c0_0 = arith.constant 0 : index
    %0 = vector.load %arg3[%c0, %c0_0] : memref<8x896xf32, #tpu.memory_space<vmem>>, vector<8x896xf32>
    %c29_i32 = arith.constant 29 : i32
    %1 = tpu.dynamic_rotate %0 by %c29_i32 dim 1 : vector<8x896xf32>, i32 -> vector<8x896xf32>
    %c0_1 = arith.constant 0 : index
    %c0_2 = arith.constant 0 : index
    %2 = vector.load %arg4[%c0_1, %c0_2] : memref<9x896xf32, #tpu.memory_space<vmem>>, vector<1x896xf32>
    %3 = vector.broadcast %2 : vector<1x896xf32> to vector<8x896xf32>
    %4 = arith.mulf %1, %3 : vector<8x896xf32>
    %c0_3 = arith.constant 0 : index
    %c0_4 = arith.constant 0 : index
    %c0_5 = arith.constant 0 : index
    %5 = vector.load %arg8[%c0_3, %c0_4, %c0_5] : memref<9x8x896xf32, #tpu.memory_space<vmem>>, vector<1x8x896xf32>
    %6 = vector.shape_cast %5 : vector<1x8x896xf32> to vector<8x896xf32>
    %7 = vector.shape_cast %4 : vector<8x896xf32> to vector<1x8x896xf32>
    tpu.vector_store %arg8[%c0_3, %c0_4, %c0_5], %7 {strides = array<i32>} : memref<9x8x896xf32, #tpu.memory_space<vmem>>, vector<1x8x896xf32>,
    %c0_6 = arith.constant 0 : index
    %c0_7 = arith.constant 0 : index
    %8 = vector.load %arg3[%c0_6, %c0_7] : memref<8x896xf32, #tpu.memory_space<vmem>>, vector<8x896xf32>
    %c28_i32 = arith.constant 28 : i32
    %9 = tpu.dynamic_rotate %8 by %c28_i32 dim 1 : vector<8x896xf32>, i32 -> vector<8x896xf32>
    %c1 = arith.constant 1 : index
    %c0_8 = arith.constant 0 : index
    %10 = vector.load %arg4[%c1, %c0_8] : memref<9x896xf32, #tpu.memory_space<vmem>>, vector<1x896xf32>
    %11 = vector.broadcast %10 : vector<1x896xf32> to vector<8x896xf32>
    %12 = arith.mulf %9, %11 : vector<8x896xf32>
    %c1_9 = arith.constant 1 : index
    %c0_10 = arith.constant 0 : index
    %c0_11 = arith.constant 0 : index
    %13 = vector.load %arg8[%c1_9, %c0_10, %c0_11] : memref<9x8x896xf32, #tpu.memory_space<vmem>>, vector<1x8x896xf32>
    %14 = vector.shape_cast %13 : vector<1x8x896xf32> to vector<8x896xf32>
    %15 = vector.shape_cast %12 : vector<8x896xf32> to vector<1x8x896xf32>
    tpu.vector_store %arg8[%c1_9, %c0_10, %c0_11], %15 {strides = array<i32>} : memref<9x8x896xf32, #tpu.memory_space<vmem>>, vector<1x8x896xf32>,
    %c0_12 = arith.constant 0 : index
    %c0_13 = arith.constant 0 : index
    %16 = vector.load %arg3[%c0_12, %c0_13] : memref<8x896xf32, #tpu.memory_space<vmem>>, vector<8x896xf32>
    %c27_i32 = arith.constant 27 : i32
    %17 = tpu.dynamic_rotate %16 by %c27_i32 dim 1 : vector<8x896xf32>, i32 -> vector<8x896xf32>
    %c2 = arith.constant 2 : index
    %c0_14 = arith.constant 0 : index
    %18 = vector.load %arg4[%c2, %c0_14] : memref<9x896xf32, #tpu.memory_space<vmem>>, vector<1x896xf32>
    %19 = vector.broadcast %18 : vector<1x896xf32> to vector<8x896xf32>
    %20 = arith.mulf %17, %19 : vector<8x896xf32>
    %c2_15 = arith.constant 2 : index
    %c0_16 = arith.constant 0 : index
    %c0_17 = arith.constant 0 : index
    %21 = vector.load %arg8[%c2_15, %c0_16, %c0_17] : memref<9x8x896xf32, #tpu.memory_space<vmem>>, vector<1x8x896xf32>
    %22 = vector.shape_cast %21 : vector<1x8x896xf32> to vector<8x896xf32>
    %23 = vector.shape_cast %20 : vector<8x896xf32> to vector<1x8x896xf32>
    tpu.vector_store %arg8[%c2_15, %c0_16, %c0_17], %23 {strides = array<i32>} : memref<9x8x896xf32, #tpu.memory_space<vmem>>, vector<1x8x896xf32>,
    %c0_18 = arith.constant 0 : index
    %c0_19 = arith.constant 0 : index
    %24 = vector.load %arg3[%c0_18, %c0_19] : memref<8x896xf32, #tpu.memory_space<vmem>>, vector<8x896xf32>
    %c1_i32 = arith.constant 1 : i32
    %25 = tpu.dynamic_rotate %24 by %c1_i32 dim 1 : vector<8x896xf32>, i32 -> vector<8x896xf32>
    %c3 = arith.constant 3 : index
    %c0_20 = arith.constant 0 : index
    %26 = vector.load %arg4[%c3, %c0_20] : memref<9x896xf32, #tpu.memory_space<vmem>>, vector<1x896xf32>
    %27 = vector.broadcast %26 : vector<1x896xf32> to vector<8x896xf32>
    %28 = arith.mulf %25, %27 : vector<8x896xf32>
    %c3_21 = arith.constant 3 : index
    %c0_22 = arith.constant 0 : index
    %c0_23 = arith.constant 0 : index
    %29 = vector.load %arg8[%c3_21, %c0_22, %c0_23] : memref<9x8x896xf32, #tpu.memory_space<vmem>>, vector<1x8x896xf32>
    %30 = vector.shape_cast %29 : vector<1x8x896xf32> to vector<8x896xf32>
    %31 = vector.shape_cast %28 : vector<8x896xf32> to vector<1x8x896xf32>
    tpu.vector_store %arg8[%c3_21, %c0_22, %c0_23], %31 {strides = array<i32>} : memref<9x8x896xf32, #tpu.memory_space<vmem>>, vector<1x8x896xf32>,
    %c0_24 = arith.constant 0 : index
    %c0_25 = arith.constant 0 : index
    %32 = vector.load %arg3[%c0_24, %c0_25] : memref<8x896xf32, #tpu.memory_space<vmem>>, vector<8x896xf32>
    %c4 = arith.constant 4 : index
    %c0_26 = arith.constant 0 : index
    %33 = vector.load %arg4[%c4, %c0_26] : memref<9x896xf32, #tpu.memory_space<vmem>>, vector<1x896xf32>
    %34 = vector.broadcast %33 : vector<1x896xf32> to vector<8x896xf32>
    %35 = arith.mulf %32, %34 : vector<8x896xf32>
    %c4_27 = arith.constant 4 : index
    %c0_28 = arith.constant 0 : index
    %c0_29 = arith.constant 0 : index
    %36 = vector.load %arg8[%c4_27, %c0_28, %c0_29] : memref<9x8x896xf32, #tpu.memory_space<vmem>>, vector<1x8x896xf32>
    %37 = vector.shape_cast %36 : vector<1x8x896xf32> to vector<8x896xf32>
    %38 = vector.shape_cast %35 : vector<8x896xf32> to vector<1x8x896xf32>
    tpu.vector_store %arg8[%c4_27, %c0_28, %c0_29], %38 {strides = array<i32>} : memref<9x8x896xf32, #tpu.memory_space<vmem>>, vector<1x8x896xf32>,
    %c0_30 = arith.constant 0 : index
    %c0_31 = arith.constant 0 : index
    %39 = vector.load %arg3[%c0_30, %c0_31] : memref<8x896xf32, #tpu.memory_space<vmem>>, vector<8x896xf32>
    %c895_i32 = arith.constant 895 : i32
    %40 = tpu.dynamic_rotate %39 by %c895_i32 dim 1 : vector<8x896xf32>, i32 -> vector<8x896xf32>
    %c5 = arith.constant 5 : index
    %c0_32 = arith.constant 0 : index
    %41 = vector.load %arg4[%c5, %c0_32] : memref<9x896xf32, #tpu.memory_space<vmem>>, vector<1x896xf32>
    %42 = vector.broadcast %41 : vector<1x896xf32> to vector<8x896xf32>
    %43 = arith.mulf %40, %42 : vector<8x896xf32>
    %c5_33 = arith.constant 5 : index
    %c0_34 = arith.constant 0 : index
    %c0_35 = arith.constant 0 : index
    %44 = vector.load %arg8[%c5_33, %c0_34, %c0_35] : memref<9x8x896xf32, #tpu.memory_space<vmem>>, vector<1x8x896xf32>
    %45 = vector.shape_cast %44 : vector<1x8x896xf32> to vector<8x896xf32>
    %46 = vector.shape_cast %43 : vector<8x896xf32> to vector<1x8x896xf32>
    tpu.vector_store %arg8[%c5_33, %c0_34, %c0_35], %46 {strides = array<i32>} : memref<9x8x896xf32, #tpu.memory_space<vmem>>, vector<1x8x896xf32>,
    %c0_36 = arith.constant 0 : index
    %c0_37 = arith.constant 0 : index
    %47 = vector.load %arg3[%c0_36, %c0_37] : memref<8x896xf32, #tpu.memory_space<vmem>>, vector<8x896xf32>
    %c869_i32 = arith.constant 869 : i32
    %48 = tpu.dynamic_rotate %47 by %c869_i32 dim 1 : vector<8x896xf32>, i32 -> vector<8x896xf32>
    %c6 = arith.constant 6 : index
    %c0_38 = arith.constant 0 : index
    %49 = vector.load %arg4[%c6, %c0_38] : memref<9x896xf32, #tpu.memory_space<vmem>>, vector<1x896xf32>
    %50 = vector.broadcast %49 : vector<1x896xf32> to vector<8x896xf32>
    %51 = arith.mulf %48, %50 : vector<8x896xf32>
    %c6_39 = arith.constant 6 : index
    %c0_40 = arith.constant 0 : index
    %c0_41 = arith.constant 0 : index
    %52 = vector.load %arg8[%c6_39, %c0_40, %c0_41] : memref<9x8x896xf32, #tpu.memory_space<vmem>>, vector<1x8x896xf32>
    %53 = vector.shape_cast %52 : vector<1x8x896xf32> to vector<8x896xf32>
    %54 = vector.shape_cast %51 : vector<8x896xf32> to vector<1x8x896xf32>
    tpu.vector_store %arg8[%c6_39, %c0_40, %c0_41], %54 {strides = array<i32>} : memref<9x8x896xf32, #tpu.memory_space<vmem>>, vector<1x8x896xf32>,
    %c0_42 = arith.constant 0 : index
    %c0_43 = arith.constant 0 : index
    %55 = vector.load %arg3[%c0_42, %c0_43] : memref<8x896xf32, #tpu.memory_space<vmem>>, vector<8x896xf32>
    %c868_i32 = arith.constant 868 : i32
    %56 = tpu.dynamic_rotate %55 by %c868_i32 dim 1 : vector<8x896xf32>, i32 -> vector<8x896xf32>
    %c7 = arith.constant 7 : index
    %c0_44 = arith.constant 0 : index
    %57 = vector.load %arg4[%c7, %c0_44] : memref<9x896xf32, #tpu.memory_space<vmem>>, vector<1x896xf32>
    %58 = vector.broadcast %57 : vector<1x896xf32> to vector<8x896xf32>
    %59 = arith.mulf %56, %58 : vector<8x896xf32>
    %c7_45 = arith.constant 7 : index
    %c0_46 = arith.constant 0 : index
    %c0_47 = arith.constant 0 : index
    %60 = vector.load %arg8[%c7_45, %c0_46, %c0_47] : memref<9x8x896xf32, #tpu.memory_space<vmem>>, vector<1x8x896xf32>
    %61 = vector.shape_cast %60 : vector<1x8x896xf32> to vector<8x896xf32>
    %62 = vector.shape_cast %59 : vector<8x896xf32> to vector<1x8x896xf32>
    tpu.vector_store %arg8[%c7_45, %c0_46, %c0_47], %62 {strides = array<i32>} : memref<9x8x896xf32, #tpu.memory_space<vmem>>, vector<1x8x896xf32>,
    %c0_48 = arith.constant 0 : index
    %c0_49 = arith.constant 0 : index
    %63 = vector.load %arg3[%c0_48, %c0_49] : memref<8x896xf32, #tpu.memory_space<vmem>>, vector<8x896xf32>
    %c867_i32 = arith.constant 867 : i32
    %64 = tpu.dynamic_rotate %63 by %c867_i32 dim 1 : vector<8x896xf32>, i32 -> vector<8x896xf32>
    %c8 = arith.constant 8 : index
    %c0_50 = arith.constant 0 : index
    %65 = vector.load %arg4[%c8, %c0_50] : memref<9x896xf32, #tpu.memory_space<vmem>>, vector<1x896xf32>
    %66 = vector.broadcast %65 : vector<1x896xf32> to vector<8x896xf32>
    %67 = arith.mulf %64, %66 : vector<8x896xf32>
    %c8_51 = arith.constant 8 : index
    %c0_52 = arith.constant 0 : index
    %c0_53 = arith.constant 0 : index
    %68 = vector.load %arg8[%c8_51, %c0_52, %c0_53] : memref<9x8x896xf32, #tpu.memory_space<vmem>>, vector<1x8x896xf32>
    %69 = vector.shape_cast %68 : vector<1x8x896xf32> to vector<8x896xf32>
    %70 = vector.shape_cast %67 : vector<8x896xf32> to vector<1x8x896xf32>
    tpu.vector_store %arg8[%c8_51, %c0_52, %c0_53], %70 {strides = array<i32>} : memref<9x8x896xf32, #tpu.memory_space<vmem>>, vector<1x8x896xf32>,
    %c0_54 = arith.constant 0 : index
    %c0_55 = arith.constant 0 : index
    %71 = vector.load %arg6[%c0_54, %c0_55] : memref<1x128xf32, #tpu.memory_space<vmem>>, vector<1x128xf32>
    %72 = vector.shape_cast %71 : vector<1x128xf32> to vector<1x128xf32>
    %73 = vector.broadcast %72 : vector<1x128xf32> to vector<8x128xf32>
    %c0_56 = arith.constant 0 : index
    %c0_57 = arith.constant 0 : index
    %74 = vector.load %arg7[%c0_56, %c0_57] : memref<8x128xf32, #tpu.memory_space<vmem>>, vector<8x128xf32>
    tpu.vector_store %arg7[%c0_56, %c0_57], %73 {strides = array<i32>} : memref<8x128xf32, #tpu.memory_space<vmem>>, vector<8x128xf32>,
    %c0_i32 = arith.constant 0 : i32
    %c16_i32 = arith.constant 16 : i32
    %75 = arith.addi %c0_i32, %c16_i32 : i32
    %c1_i32_58 = arith.constant 1 : i32
    scf.for %arg9 = %c0_i32 to %75 step %c1_i32_58  : i32 {
      %c1_i32_60 = arith.constant 1 : i32
      %76 = arith.muli %arg9, %c1_i32_60 : i32
      %c0_i32_61 = arith.constant 0 : i32
      %77 = arith.addi %c0_i32_61, %76 : i32
      %78 = arith.index_cast %77 : i32 to index
      %c0_62 = arith.constant 0 : index
      %79 = memref.load %arg1[%78, %c0_62] : memref<16x9xf32, #tpu.memory_space<smem>>
      %c0_63 = arith.constant 0 : index
      %c0_64 = arith.constant 0 : index
      %c0_65 = arith.constant 0 : index
      %80 = vector.load %arg8[%c0_63, %c0_64, %c0_65] : memref<9x8x896xf32, #tpu.memory_space<vmem>>, vector<1x8x896xf32>
      %81 = vector.shape_cast %80 : vector<1x8x896xf32> to vector<8x896xf32>
      %82 = vector.broadcast %79 : f32 to vector<8x896xf32>
      %83 = arith.mulf %82, %81 : vector<8x896xf32>
      %84 = arith.index_cast %77 : i32 to index
      %c1_66 = arith.constant 1 : index
      %85 = memref.load %arg1[%84, %c1_66] : memref<16x9xf32, #tpu.memory_space<smem>>
      %c1_67 = arith.constant 1 : index
      %c0_68 = arith.constant 0 : index
      %c0_69 = arith.constant 0 : index
      %86 = vector.load %arg8[%c1_67, %c0_68, %c0_69] : memref<9x8x896xf32, #tpu.memory_space<vmem>>, vector<1x8x896xf32>
      %87 = vector.shape_cast %86 : vector<1x8x896xf32> to vector<8x896xf32>
      %88 = vector.broadcast %85 : f32 to vector<8x896xf32>
      %89 = arith.mulf %88, %87 : vector<8x896xf32>
      %90 = arith.addf %83, %89 : vector<8x896xf32>
      %91 = arith.index_cast %77 : i32 to index
      %c2_70 = arith.constant 2 : index
      %92 = memref.load %arg1[%91, %c2_70] : memref<16x9xf32, #tpu.memory_space<smem>>
      %c2_71 = arith.constant 2 : index
      %c0_72 = arith.constant 0 : index
      %c0_73 = arith.constant 0 : index
      %93 = vector.load %arg8[%c2_71, %c0_72, %c0_73] : memref<9x8x896xf32, #tpu.memory_space<vmem>>, vector<1x8x896xf32>
      %94 = vector.shape_cast %93 : vector<1x8x896xf32> to vector<8x896xf32>
      %95 = vector.broadcast %92 : f32 to vector<8x896xf32>
      %96 = arith.mulf %95, %94 : vector<8x896xf32>
      %97 = arith.addf %90, %96 : vector<8x896xf32>
      %98 = arith.index_cast %77 : i32 to index
      %c3_74 = arith.constant 3 : index
      %99 = memref.load %arg1[%98, %c3_74] : memref<16x9xf32, #tpu.memory_space<smem>>
      %c3_75 = arith.constant 3 : index
      %c0_76 = arith.constant 0 : index
      %c0_77 = arith.constant 0 : index
      %100 = vector.load %arg8[%c3_75, %c0_76, %c0_77] : memref<9x8x896xf32, #tpu.memory_space<vmem>>, vector<1x8x896xf32>
      %101 = vector.shape_cast %100 : vector<1x8x896xf32> to vector<8x896xf32>
      %102 = vector.broadcast %99 : f32 to vector<8x896xf32>
      %103 = arith.mulf %102, %101 : vector<8x896xf32>
      %104 = arith.addf %97, %103 : vector<8x896xf32>
      %105 = arith.index_cast %77 : i32 to index
      %c4_78 = arith.constant 4 : index
      %106 = memref.load %arg1[%105, %c4_78] : memref<16x9xf32, #tpu.memory_space<smem>>
      %c4_79 = arith.constant 4 : index
      %c0_80 = arith.constant 0 : index
      %c0_81 = arith.constant 0 : index
      %107 = vector.load %arg8[%c4_79, %c0_80, %c0_81] : memref<9x8x896xf32, #tpu.memory_space<vmem>>, vector<1x8x896xf32>
      %108 = vector.shape_cast %107 : vector<1x8x896xf32> to vector<8x896xf32>
      %109 = vector.broadcast %106 : f32 to vector<8x896xf32>
      %110 = arith.mulf %109, %108 : vector<8x896xf32>
      %111 = arith.addf %104, %110 : vector<8x896xf32>
      %112 = arith.index_cast %77 : i32 to index
      %c5_82 = arith.constant 5 : index
      %113 = memref.load %arg1[%112, %c5_82] : memref<16x9xf32, #tpu.memory_space<smem>>
      %c5_83 = arith.constant 5 : index
      %c0_84 = arith.constant 0 : index
      %c0_85 = arith.constant 0 : index
      %114 = vector.load %arg8[%c5_83, %c0_84, %c0_85] : memref<9x8x896xf32, #tpu.memory_space<vmem>>, vector<1x8x896xf32>
      %115 = vector.shape_cast %114 : vector<1x8x896xf32> to vector<8x896xf32>
      %116 = vector.broadcast %113 : f32 to vector<8x896xf32>
      %117 = arith.mulf %116, %115 : vector<8x896xf32>
      %118 = arith.addf %111, %117 : vector<8x896xf32>
      %119 = arith.index_cast %77 : i32 to index
      %c6_86 = arith.constant 6 : index
      %120 = memref.load %arg1[%119, %c6_86] : memref<16x9xf32, #tpu.memory_space<smem>>
      %c6_87 = arith.constant 6 : index
      %c0_88 = arith.constant 0 : index
      %c0_89 = arith.constant 0 : index
      %121 = vector.load %arg8[%c6_87, %c0_88, %c0_89] : memref<9x8x896xf32, #tpu.memory_space<vmem>>, vector<1x8x896xf32>
      %122 = vector.shape_cast %121 : vector<1x8x896xf32> to vector<8x896xf32>
      %123 = vector.broadcast %120 : f32 to vector<8x896xf32>
      %124 = arith.mulf %123, %122 : vector<8x896xf32>
      %125 = arith.addf %118, %124 : vector<8x896xf32>
      %126 = arith.index_cast %77 : i32 to index
      %c7_90 = arith.constant 7 : index
      %127 = memref.load %arg1[%126, %c7_90] : memref<16x9xf32, #tpu.memory_space<smem>>
      %c7_91 = arith.constant 7 : index
      %c0_92 = arith.constant 0 : index
      %c0_93 = arith.constant 0 : index
      %128 = vector.load %arg8[%c7_91, %c0_92, %c0_93] : memref<9x8x896xf32, #tpu.memory_space<vmem>>, vector<1x8x896xf32>
      %129 = vector.shape_cast %128 : vector<1x8x896xf32> to vector<8x896xf32>
      %130 = vector.broadcast %127 : f32 to vector<8x896xf32>
      %131 = arith.mulf %130, %129 : vector<8x896xf32>
      %132 = arith.addf %125, %131 : vector<8x896xf32>
      %133 = arith.index_cast %77 : i32 to index
      %c8_94 = arith.constant 8 : index
      %134 = memref.load %arg1[%133, %c8_94] : memref<16x9xf32, #tpu.memory_space<smem>>
      %c8_95 = arith.constant 8 : index
      %c0_96 = arith.constant 0 : index
      %c0_97 = arith.constant 0 : index
      %135 = vector.load %arg8[%c8_95, %c0_96, %c0_97] : memref<9x8x896xf32, #tpu.memory_space<vmem>>, vector<1x8x896xf32>
      %136 = vector.shape_cast %135 : vector<1x8x896xf32> to vector<8x896xf32>
      %137 = vector.broadcast %134 : f32 to vector<8x896xf32>
      %138 = arith.mulf %137, %136 : vector<8x896xf32>
      %139 = arith.addf %132, %138 : vector<8x896xf32>
      %140 = arith.index_cast %77 : i32 to index
      %141 = memref.load %arg2[%140] : memref<16xf32, #tpu.memory_space<smem>>
      %142 = vector.broadcast %141 : f32 to vector<8x896xf32>
      %143 = arith.addf %139, %142 : vector<8x896xf32>
      %cst = arith.constant 0.000000e+00 : f32
      %144 = vector.broadcast %cst : f32 to vector<8x896xf32>
      %145 = arith.maximumf %143, %144 : vector<8x896xf32>
      %146 = arith.truncf %145 : vector<8x896xf32> to vector<8x896xbf16>
      %c0_98 = arith.constant 0 : index
      %c0_99 = arith.constant 0 : index
      %147 = vector.load %arg7[%c0_98, %c0_99] : memref<8x128xf32, #tpu.memory_space<vmem>>, vector<8x128xf32>
      %148 = arith.index_cast %77 : i32 to index
      %c0_100 = arith.constant 0 : index
      %c0_101 = arith.constant 0 : index
      %149 = vector.load %arg5[%148, %c0_100, %c0_101] : memref<16x896x128xbf16, #tpu.memory_space<vmem>>, vector<1x896x128xbf16>
      %150 = vector.shape_cast %149 : vector<1x896x128xbf16> to vector<896x128xbf16>
      %cst_102 = arith.constant dense<0.000000e+00> : vector<8x128xf32>
      %151 = tpu.matmul %146, %150, %cst_102 {dimension_numbers = #tpu.dot_dimension_numbers<[1], [0], [0], [1], [0, 0, 1, 1], [], []>} : vector<8x896xbf16>, vector<896x128xbf16>, vector<8x128xf32> -> vector<8x128xf32>
      %152 = arith.addf %147, %151 : vector<8x128xf32>
      %c0_103 = arith.constant 0 : index
      %c0_104 = arith.constant 0 : index
      %153 = vector.load %arg7[%c0_103, %c0_104] : memref<8x128xf32, #tpu.memory_space<vmem>>, vector<8x128xf32>
      tpu.vector_store %arg7[%c0_103, %c0_104], %152 {strides = array<i32>} : memref<8x128xf32, #tpu.memory_space<vmem>>, vector<8x128xf32>,
    }
    %c16_i32_59 = arith.constant 16 : i32
    return
  }
  func.func @transform_0(%arg0: i32) -> (i32, i32) {
    %c0_i32 = arith.constant 0 : i32
    %c0_i32_0 = arith.constant 0 : i32
    %c0_i32_1 = arith.constant 0 : i32
    return %c0_i32, %c0_i32_0 : i32, i32
  }
  func.func @transform_1(%arg0: i32) -> i32 {
    %c0_i32 = arith.constant 0 : i32
    %c0_i32_0 = arith.constant 0 : i32
    return %c0_i32 : i32
  }
  func.func @transform_2(%arg0: i32) -> (i32, i32) {
    %c0_i32 = arith.constant 0 : i32
    %c0_i32_0 = arith.constant 0 : i32
    return %arg0, %c0_i32 : i32, i32
  }
  func.func @transform_3(%arg0: i32) -> (i32, i32) {
    %c0_i32 = arith.constant 0 : i32
    %c0_i32_0 = arith.constant 0 : i32
    %c0_i32_1 = arith.constant 0 : i32
    return %c0_i32, %c0_i32_0 : i32, i32
  }
  func.func @transform_4(%arg0: i32) -> (i32, i32, i32) {
    %c0_i32 = arith.constant 0 : i32
    %c0_i32_0 = arith.constant 0 : i32
    %c0_i32_1 = arith.constant 0 : i32
    %c0_i32_2 = arith.constant 0 : i32
    return %c0_i32, %c0_i32_0, %c0_i32_1 : i32, i32, i32
  }
  func.func @transform_5(%arg0: i32) -> (i32, i32) {
    %c0_i32 = arith.constant 0 : i32
    %c0_i32_0 = arith.constant 0 : i32
    %c0_i32_1 = arith.constant 0 : i32
    return %c0_i32, %c0_i32_0 : i32, i32
  }
  func.func @transform_6(%arg0: i32) -> (i32, i32) {
    %c0_i32 = arith.constant 0 : i32
    %c0_i32_0 = arith.constant 0 : i32
    return %arg0, %c0_i32 : i32, i32
  }
}

</mosaic_0001>

<llo_original>
// kernel: cnn_forward.1
$region0: #{cnn_forward.1}
  #allocation0 [shape = 'u32[]', space=smem, size = 0x4, offset = 0x4, fixed_abs, tag = 'smem constant byte address 0x4 - core index']
  #allocation1 [shape = 'u32[144,128]{1,0:T(1,128)}', space=vmem, size = 0x12000, scoped, tag = 'internal scratch']
  #allocation2 [shape = 'f32[9,8,896]{2,1,0:T(8,128)}', space=vmem, size = 0x3f000, scoped, tag = 'scratch operand']
  %s0 = inlined_call_operand.vmem [shape: f32[16,9], index: 0, kind: input, shape index: {}]
  %s1 = inlined_call_operand.vmem [shape: f32[16], index: 1, kind: input, shape index: {}]
  %s2 = inlined_call_operand.vmem [shape: f32[8,896], index: 2, kind: input, shape index: {}]
  %s3 = inlined_call_operand.vmem [shape: f32[9,896], index: 3, kind: input, shape index: {}]
  %s4 = inlined_call_operand.vmem [shape: bf16[16,896,128], index: 4, kind: input, shape index: {}]
  %s5 = inlined_call_operand.vmem [shape: f32[1,128], index: 5, kind: input, shape index: {}]
  %s6 = inlined_call_operand.vmem [shape: f32[8,128], index: 6, kind: output, shape index: {}]
  %s7 = sld [smem:[#allocation0]]
  $region49: #{cnn_forward.1} parent=0
    _
  %s9 = ssub.s32 1, %s7
  %s10 = scalar_select 0, %s9, %s7
  $region1: #{cnn_forward.1} parent=0
    #allocation3 [shape = 'u8[8192]{0}', space=smem, size = 0x2000, scoped, tag = 'input window, operand 0, single buffered']
    #allocation4 [shape = 's32[1]{0}', space=sflag, size = 0x4, scoped, tag = 'scoped memory for cnn_forward.1']
    #allocation5 [shape = 'u8[512]{0}', space=smem, size = 0x200, scoped, tag = 'input window, operand 1, single buffered']
    #allocation6 [shape = 's32[1]{0}', space=sflag, size = 0x4, scoped, tag = 'scoped memory for cnn_forward.1']
    %11 = vsyncpa [#allocation4], 0
    %12 = vsyncpa [#allocation6], 0
    // Predicated region
    $region2: #{cnn_forward.1} parent=1 // pred_check
      _
    $region3: #{cnn_forward.1} parent=1 // pred_check_branch
      %14 = sbr.rel (0) target = $region5
    $region4: #{cnn_forward.1} parent=1 // pred_region
      %s16 = ssub.s32 256, 256
      %17 = vsyncadd [#allocation4], %s16
      %s18 = sshll.u32 %s0, 4
      %s19 = int_to_ptr.vmem [resolvable:$true] %s18
      %24 = dma.vmem_to_smem %s19, 256, [#allocation3], [#allocation4], 128, 128, 8
    $region5: #{cnn_forward.1} parent=1 // pred_fallthru
      _
    // Predicated region
    $region6: #{cnn_forward.1} parent=1 // pred_check
      _
    $region7: #{cnn_forward.1} parent=1 // pred_check_branch
      %26 = sbr.rel (0) target = $region9
    $region8: #{cnn_forward.1} parent=1 // pred_region
      %s28 = ssub.s32 16, 16
      %29 = vsyncadd [#allocation6], %s28
      %s31 = sshll.u32 %s1, 4
      %s32 = int_to_ptr.vmem [resolvable:$true] %s31
      %34 = dma.vmem_to_smem %s32, 16, [#allocation5], [#allocation6]
    $region9: #{cnn_forward.1} parent=1 // pred_fallthru
      _
    // Predicated region
    $region10: #{cnn_forward.1} parent=1 // pred_check
      _
    $region11: #{cnn_forward.1} parent=1 // pred_check_branch
      %36 = sbr.rel (0) target = $region13
    $region12: #{cnn_forward.1} parent=1 // pred_region
      _
    $region13: #{cnn_forward.1} parent=1 // pred_fallthru
      _
    // Predicated region
    $region14: #{cnn_forward.1} parent=1 // pred_check
      _
    $region15: #{cnn_forward.1} parent=1 // pred_check_branch
      %38 = sbr.rel (0) target = $region17
    $region16: #{cnn_forward.1} parent=1 // pred_region
      _
    $region17: #{cnn_forward.1} parent=1 // pred_fallthru
      _
    // Predicated region
    $region18: #{cnn_forward.1} parent=1 // pred_check
      _
    $region19: #{cnn_forward.1} parent=1 // pred_check_branch
      %40 = sbr.rel (0) target = $region21
    $region20: #{cnn_forward.1} parent=1 // pred_region
      _
    $region21: #{cnn_forward.1} parent=1 // pred_fallthru
      _
    // Predicated region
    $region22: #{cnn_forward.1} parent=1 // pred_check
      _
    $region23: #{cnn_forward.1} parent=1 // pred_check_branch
      %42 = sbr.rel (0) target = $region25
    $region24: #{cnn_forward.1} parent=1 // pred_region
      _
    $region25: #{cnn_forward.1} parent=1 // pred_fallthru
      _
    // Predicated region
    $region26: #{cnn_forward.1} parent=1 // pred_check
      _
    $region27: #{cnn_forward.1} parent=1 // pred_check_branch
      %44 = sbr.rel (0) target = $region29
    $region28: #{cnn_forward.1} parent=1 // pred_region
      %45 = dma.done [#allocation4], 256
    $region29: #{cnn_forward.1} parent=1 // pred_fallthru
      _
    // Predicated region
    $region30: #{cnn_forward.1} parent=1 // pred_check
      _
    $region31: #{cnn_forward.1} parent=1 // pred_check_branch
      %47 = sbr.rel (0) target = $region33
    $region32: #{cnn_forward.1} parent=1 // pred_region
      %48 = dma.done [#allocation6], 16
    $region33: #{cnn_forward.1} parent=1 // pred_fallthru
      _
    %49 = sfence
    %v51 = vld [vmem:[%s2] sm:$0xff]
    %v52 = vld [vmem:[%s2 + $0x8] sm:$0xff]
    %v53 = vld [vmem:[%s2 + $0x10] sm:$0xff]
    %v54 = vld [vmem:[%s2 + $0x18] sm:$0xff]
    %v55 = vld [vmem:[%s2 + $0x20] sm:$0xff]
    %v56 = vld [vmem:[%s2 + $0x28] sm:$0xff]
    %v57 = vld [vmem:[%s2 + $0x30] sm:$0xff]
    %58 = vrot.lane.b32.xlu0 %v51, 29
    %v59 = vpop.permute.xlu0 %58
    %60 = vrot.lane.b32.xlu0 %v52, 29
    %v61 = vpop.permute.xlu0 %60
    %62 = vrot.lane.b32.xlu0 %v53, 29
    %v63 = vpop.permute.xlu0 %62
    %64 = vrot.lane.b32.xlu0 %v54, 29
    %v65 = vpop.permute.xlu0 %64
    %66 = vrot.lane.b32.xlu0 %v55, 29
    %v67 = vpop.permute.xlu0 %66
    %68 = vrot.lane.b32.xlu0 %v56, 29
    %v69 = vpop.permute.xlu0 %68
    %70 = vrot.lane.b32.xlu0 %v57, 29
    %v71 = vpop.permute.xlu0 %70
    %v72 = vlaneseq
    %v73 = vand.u32 %v72, 127
    %vm74 = vcmp.lt.s32.totalorder %v73, 29
    %v75 = vsel %vm74, %v69, %v71
    %v76 = vsel %vm74, %v67, %v69
    %v77 = vsel %vm74, %v65, %v67
    %v78 = vsel %vm74, %v63, %v65
    %v79 = vsel %vm74, %v61, %v63
    %v80 = vsel %vm74, %v59, %v61
    %v81 = vsel %vm74, %v71, %v59
    %v82 = vld [vmem:[%s3] ss:$8 sm:$0xf]
    %v83 = vld [vmem:[%s3] ss:$8 sm:$0xf0]
    %v84 = vor.u32 %v82, %v83
    %v86 = vlaneseq
    %v87 = vshrl.u32 %v86, 7
    %v88 = vsub.s32 0, %v87
    %v89 = vrot.slane %v84, %v88
    %v90 = vlaneseq
    %v91 = vshrl.u32 %v90, 7
    %v92 = vsub.s32 1, %v91
    %v93 = vrot.slane %v84, %v92
    %v94 = vlaneseq
    %v95 = vshrl.u32 %v94, 7
    %v96 = vsub.s32 2, %v95
    %v97 = vrot.slane %v84, %v96
    %v98 = vlaneseq
    %v99 = vshrl.u32 %v98, 7
    %v100 = vsub.s32 3, %v99
    %v101 = vrot.slane %v84, %v100
    %v102 = vlaneseq
    %v103 = vshrl.u32 %v102, 7
    %v104 = vsub.s32 4, %v103
    %v105 = vrot.slane %v84, %v104
    %v106 = vlaneseq
    %v107 = vshrl.u32 %v106, 7
    %v108 = vsub.s32 5, %v107
    %v109 = vrot.slane %v84, %v108
    %v110 = vlaneseq
    %v111 = vshrl.u32 %v110, 7
    %v112 = vsub.s32 6, %v111
    %v113 = vrot.slane %v84, %v112
    %v121 = vmul.f32 %v81, %v89
    %v122 = vmul.f32 %v80, %v93
    %v123 = vmul.f32 %v79, %v97
    %v124 = vmul.f32 %v78, %v101
    %v125 = vmul.f32 %v77, %v105
    %v126 = vmul.f32 %v76, %v109
    %v127 = vmul.f32 %v75, %v113
    %128 = vst [vmem:[#allocation2] sm:$0xff] %v121
    %129 = vst [vmem:[#allocation2 + $0x8] sm:$0xff] %v122
    %130 = vst [vmem:[#allocation2 + $0x10] sm:$0xff] %v123
    %131 = vst [vmem:[#allocation2 + $0x18] sm:$0xff] %v124
    %132 = vst [vmem:[#allocation2 + $0x20] sm:$0xff] %v125
    %133 = vst [vmem:[#allocation2 + $0x28] sm:$0xff] %v126
    %134 = vst [vmem:[#allocation2 + $0x30] sm:$0xff] %v127
    %v135 = vld [vmem:[%s2] sm:$0xff]
    %v136 = vld [vmem:[%s2 + $0x8] sm:$0xff]
    %v137 = vld [vmem:[%s2 + $0x10] sm:$0xff]
    %v138 = vld [vmem:[%s2 + $0x18] sm:$0xff]
    %v139 = vld [vmem:[%s2 + $0x20] sm:$0xff]
    %v140 = vld [vmem:[%s2 + $0x28] sm:$0xff]
    %v141 = vld [vmem:[%s2 + $0x30] sm:$0xff]
    %142 = vrot.lane.b32.xlu0 %v135, 28
    %v143 = vpop.permute.xlu0 %142
    %144 = vrot.lane.b32.xlu0 %v136, 28
    %v145 = vpop.permute.xlu0 %144
    %146 = vrot.lane.b32.xlu0 %v137, 28
    %v147 = vpop.permute.xlu0 %146
    %148 = vrot.lane.b32.xlu0 %v138, 28
    %v149 = vpop.permute.xlu0 %148
    %150 = vrot.lane.b32.xlu0 %v139, 28
    %v151 = vpop.permute.xlu0 %150
    %152 = vrot.lane.b32.xlu0 %v140, 28
    %v153 = vpop.permute.xlu0 %152
    %154 = vrot.lane.b32.xlu0 %v141, 28
    %v155 = vpop.permute.xlu0 %154
    %vm156 = vcmp.lt.s32.totalorder %v73, 28
    %v157 = vsel %vm156, %v153, %v155
    %v158 = vsel %vm156, %v151, %v153
    %v159 = vsel %vm156, %v149, %v151
    %v160 = vsel %vm156, %v147, %v149
    %v161 = vsel %vm156, %v145, %v147
    %v162 = vsel %vm156, %v143, %v145
    %v163 = vsel %vm156, %v155, %v143
    %s164 = scalar_lea.vmem %s3, 1
    %v165 = vld [vmem:[%s164] ss:$8 sm:$0xf]
    %v166 = vld [vmem:[%s164] ss:$8 sm:$0xf0]
    %v167 = vor.u32 %v165, %v166
    %v169 = vlaneseq
    %v170 = vshrl.u32 %v169, 7
    %v171 = vsub.s32 0, %v170
    %v172 = vrot.slane %v167, %v171
    %v173 = vlaneseq
    %v174 = vshrl.u32 %v173, 7
    %v175 = vsub.s32 1, %v174
    %v176 = vrot.slane %v167, %v175
    %v177 = vlaneseq
    %v178 = vshrl.u32 %v177, 7
    %v179 = vsub.s32 2, %v178
    %v180 = vrot.slane %v167, %v179
    %v181 = vlaneseq
    %v182 = vshrl.u32 %v181, 7
    %v183 = vsub.s32 3, %v182
    %v184 = vrot.slane %v167, %v183
    %v185 = vlaneseq
    %v186 = vshrl.u32 %v185, 7
    %v187 = vsub.s32 4, %v186
    %v188 = vrot.slane %v167, %v187
    %v189 = vlaneseq
    %v190 = vshrl.u32 %v189, 7
    %v191 = vsub.s32 5, %v190
    %v192 = vrot.slane %v167, %v191
    %v193 = vlaneseq
    %v194 = vshrl.u32 %v193, 7
    %v195 = vsub.s32 6, %v194
    %v196 = vrot.slane %v167, %v195
    %v204 = vmul.f32 %v163, %v172
    %v205 = vmul.f32 %v162, %v176
    %v206 = vmul.f32 %v161, %v180
    %v207 = vmul.f32 %v160, %v184
    %v208 = vmul.f32 %v159, %v188
    %v209 = vmul.f32 %v158, %v192
    %v210 = vmul.f32 %v157, %v196
    %s211 = scalar_lea.vmem [#allocation2], 56
    %212 = vst [vmem:[%s211] sm:$0xff] %v204
    %213 = vst [vmem:[%s211 + $0x8] sm:$0xff] %v205
    %214 = vst [vmem:[%s211 + $0x10] sm:$0xff] %v206
    %215 = vst [vmem:[%s211 + $0x18] sm:$0xff] %v207
    %216 = vst [vmem:[%s211 + $0x20] sm:$0xff] %v208
    %217 = vst [vmem:[%s211 + $0x28] sm:$0xff] %v209
    %218 = vst [vmem:[%s211 + $0x30] sm:$0xff] %v210
    %v219 = vld [vmem:[%s2] sm:$0xff]
    %v220 = vld [vmem:[%s2 + $0x8] sm:$0xff]
    %v221 = vld [vmem:[%s2 + $0x10] sm:$0xff]
    %v222 = vld [vmem:[%s2 + $0x18] sm:$0xff]
    %v223 = vld [vmem:[%s2 + $0x20] sm:$0xff]
    %v224 = vld [vmem:[%s2 + $0x28] sm:$0xff]
    %v225 = vld [vmem:[%s2 + $0x30] sm:$0xff]
    %226 = vrot.lane.b32.xlu0 %v219, 27
    %v227 = vpop.permute.xlu0 %226
    %228 = vrot.lane.b32.xlu0 %v220, 27
    %v229 = vpop.permute.xlu0 %228
    %230 = vrot.lane.b32.xlu0 %v221, 27
    %v231 = vpop.permute.xlu0 %230
    %232 = vrot.lane.b32.xlu0 %v222, 27
    %v233 = vpop.permute.xlu0 %232
    %234 = vrot.lane.b32.xlu0 %v223, 27
    %v235 = vpop.permute.xlu0 %234
    %236 = vrot.lane.b32.xlu0 %v224, 27
    %v237 = vpop.permute.xlu0 %236
    %238 = vrot.lane.b32.xlu0 %v225, 27
    %v239 = vpop.permute.xlu0 %238
    %vm240 = vcmp.lt.s32.totalorder %v73, 27
    %v241 = vsel %vm240, %v237, %v239
    %v242 = vsel %vm240, %v235, %v237
    %v243 = vsel %vm240, %v233, %v235
    %v244 = vsel %vm240, %v231, %v233
    %v245 = vsel %vm240, %v229, %v231
    %v246 = vsel %vm240, %v227, %v229
    %v247 = vsel %vm240, %v239, %v227
    %s248 = scalar_lea.vmem %s3, 2
    %v249 = vld [vmem:[%s248] ss:$8 sm:$0xf]
    %v250 = vld [vmem:[%s248] ss:$8 sm:$0xf0]
    %v251 = vor.u32 %v249, %v250
    %v253 = vlaneseq
    %v254 = vshrl.u32 %v253, 7
    %v255 = vsub.s32 0, %v254
    %v256 = vrot.slane %v251, %v255
    %v257 = vlaneseq
    %v258 = vshrl.u32 %v257, 7
    %v259 = vsub.s32 1, %v258
    %v260 = vrot.slane %v251, %v259
    %v261 = vlaneseq
    %v262 = vshrl.u32 %v261, 7
    %v263 = vsub.s32 2, %v262
    %v264 = vrot.slane %v251, %v263
    %v265 = vlaneseq
    %v266 = vshrl.u32 %v265, 7
    %v267 = vsub.s32 3, %v266
    %v268 = vrot.slane %v251, %v267
    %v269 = vlaneseq
    %v270 = vshrl.u32 %v269, 7
    %v271 = vsub.s32 4, %v270
    %v272 = vrot.slane %v251, %v271
    %v273 = vlaneseq
    %v274 = vshrl.u32 %v273, 7
    %v275 = vsub.s32 5, %v274
    %v276 = vrot.slane %v251, %v275
    %v277 = vlaneseq
    %v278 = vshrl.u32 %v277, 7
    %v279 = vsub.s32 6, %v278
    %v280 = vrot.slane %v251, %v279
    %v288 = vmul.f32 %v247, %v256
    %v289 = vmul.f32 %v246, %v260
    %v290 = vmul.f32 %v245, %v264
    %v291 = vmul.f32 %v244, %v268
    %v292 = vmul.f32 %v243, %v272
    %v293 = vmul.f32 %v242, %v276
    %v294 = vmul.f32 %v241, %v280
    %s295 = scalar_lea.vmem [#allocation2], 112
    %296 = vst [vmem:[%s295] sm:$0xff] %v288
    %297 = vst [vmem:[%s295 + $0x8] sm:$0xff] %v289
    %298 = vst [vmem:[%s295 + $0x10] sm:$0xff] %v290
    %299 = vst [vmem:[%s295 + $0x18] sm:$0xff] %v291
    %300 = vst [vmem:[%s295 + $0x20] sm:$0xff] %v292
    %301 = vst [vmem:[%s295 + $0x28] sm:$0xff] %v293
    %302 = vst [vmem:[%s295 + $0x30] sm:$0xff] %v294
    %v303 = vld [vmem:[%s2] sm:$0xff]
    %v304 = vld [vmem:[%s2 + $0x8] sm:$0xff]
    %v305 = vld [vmem:[%s2 + $0x10] sm:$0xff]
    %v306 = vld [vmem:[%s2 + $0x18] sm:$0xff]
    %v307 = vld [vmem:[%s2 + $0x20] sm:$0xff]
    %v308 = vld [vmem:[%s2 + $0x28] sm:$0xff]
    %v309 = vld [vmem:[%s2 + $0x30] sm:$0xff]
    %310 = vrot.lane.b32.xlu0 %v303, 1
    %v311 = vpop.permute.xlu0 %310
    %312 = vrot.lane.b32.xlu0 %v304, 1
    %v313 = vpop.permute.xlu0 %312
    %314 = vrot.lane.b32.xlu0 %v305, 1
    %v315 = vpop.permute.xlu0 %314
    %316 = vrot.lane.b32.xlu0 %v306, 1
    %v317 = vpop.permute.xlu0 %316
    %318 = vrot.lane.b32.xlu0 %v307, 1
    %v319 = vpop.permute.xlu0 %318
    %320 = vrot.lane.b32.xlu0 %v308, 1
    %v321 = vpop.permute.xlu0 %320
    %322 = vrot.lane.b32.xlu0 %v309, 1
    %v323 = vpop.permute.xlu0 %322
    %vm324 = vcmp.lt.s32.totalorder %v73, 1
    %v325 = vsel %vm324, %v321, %v323
    %v326 = vsel %vm324, %v319, %v321
    %v327 = vsel %vm324, %v317, %v319
    %v328 = vsel %vm324, %v315, %v317
    %v329 = vsel %vm324, %v313, %v315
    %v330 = vsel %vm324, %v311, %v313
    %v331 = vsel %vm324, %v323, %v311
    %s332 = scalar_lea.vmem %s3, 3
    %v333 = vld [vmem:[%s332] ss:$8 sm:$0xf]
    %v334 = vld [vmem:[%s332] ss:$8 sm:$0xf0]
    %v335 = vor.u32 %v333, %v334
    %v337 = vlaneseq
    %v338 = vshrl.u32 %v337, 7
    %v339 = vsub.s32 0, %v338
    %v340 = vrot.slane %v335, %v339
    %v341 = vlaneseq
    %v342 = vshrl.u32 %v341, 7
    %v343 = vsub.s32 1, %v342
    %v344 = vrot.slane %v335, %v343
    %v345 = vlaneseq
    %v346 = vshrl.u32 %v345, 7
    %v347 = vsub.s32 2, %v346
    %v348 = vrot.slane %v335, %v347
    %v349 = vlaneseq
    %v350 = vshrl.u32 %v349, 7
    %v351 = vsub.s32 3, %v350
    %v352 = vrot.slane %v335, %v351
    %v353 = vlaneseq
    %v354 = vshrl.u32 %v353, 7
    %v355 = vsub.s32 4, %v354
    %v356 = vrot.slane %v335, %v355
    %v357 = vlaneseq
    %v358 = vshrl.u32 %v357, 7
    %v359 = vsub.s32 5, %v358
    %v360 = vrot.slane %v335, %v359
    %v361 = vlaneseq
    %v362 = vshrl.u32 %v361, 7
    %v363 = vsub.s32 6, %v362
    %v364 = vrot.slane %v335, %v363
    %v372 = vmul.f32 %v331, %v340
    %v373 = vmul.f32 %v330, %v344
    %v374 = vmul.f32 %v329, %v348
    %v375 = vmul.f32 %v328, %v352
    %v376 = vmul.f32 %v327, %v356
    %v377 = vmul.f32 %v326, %v360
    %v378 = vmul.f32 %v325, %v364
    %s379 = scalar_lea.vmem [#allocation2], 168
    %380 = vst [vmem:[%s379] sm:$0xff] %v372
    %381 = vst [vmem:[%s379 + $0x8] sm:$0xff] %v373
    %382 = vst [vmem:[%s379 + $0x10] sm:$0xff] %v374
    %383 = vst [vmem:[%s379 + $0x18] sm:$0xff] %v375
    %384 = vst [vmem:[%s379 + $0x20] sm:$0xff] %v376
    %385 = vst [vmem:[%s379 + $0x28] sm:$0xff] %v377
    %386 = vst [vmem:[%s379 + $0x30] sm:$0xff] %v378
    %v387 = vld [vmem:[%s2] sm:$0xff]
    %v388 = vld [vmem:[%s2 + $0x8] sm:$0xff]
    %v389 = vld [vmem:[%s2 + $0x10] sm:$0xff]
    %v390 = vld [vmem:[%s2 + $0x18] sm:$0xff]
    %v391 = vld [vmem:[%s2 + $0x20] sm:$0xff]
    %v392 = vld [vmem:[%s2 + $0x28] sm:$0xff]
    %v393 = vld [vmem:[%s2 + $0x30] sm:$0xff]
    %s394 = scalar_lea.vmem %s3, 4
    %v395 = vld [vmem:[%s394] ss:$8 sm:$0xf]
    %v396 = vld [vmem:[%s394] ss:$8 sm:$0xf0]
    %v397 = vor.u32 %v395, %v396
    %v399 = vlaneseq
    %v400 = vshrl.u32 %v399, 7
    %v401 = vsub.s32 0, %v400
    %v402 = vrot.slane %v397, %v401
    %v403 = vlaneseq
    %v404 = vshrl.u32 %v403, 7
    %v405 = vsub.s32 1, %v404
    %v406 = vrot.slane %v397, %v405
    %v407 = vlaneseq
    %v408 = vshrl.u32 %v407, 7
    %v409 = vsub.s32 2, %v408
    %v410 = vrot.slane %v397, %v409
    %v411 = vlaneseq
    %v412 = vshrl.u32 %v411, 7
    %v413 = vsub.s32 3, %v412
    %v414 = vrot.slane %v397, %v413
    %v415 = vlaneseq
    %v416 = vshrl.u32 %v415, 7
    %v417 = vsub.s32 4, %v416
    %v418 = vrot.slane %v397, %v417
    %v419 = vlaneseq
    %v420 = vshrl.u32 %v419, 7
    %v421 = vsub.s32 5, %v420
    %v422 = vrot.slane %v397, %v421
    %v423 = vlaneseq
    %v424 = vshrl.u32 %v423, 7
    %v425 = vsub.s32 6, %v424
    %v426 = vrot.slane %v397, %v425
    %v434 = vmul.f32 %v387, %v402
    %v435 = vmul.f32 %v388, %v406
    %v436 = vmul.f32 %v389, %v410
    %v437 = vmul.f32 %v390, %v414
    %v438 = vmul.f32 %v391, %v418
    %v439 = vmul.f32 %v392, %v422
    %v440 = vmul.f32 %v393, %v426
    %s441 = scalar_lea.vmem [#allocation2], 224
    %442 = vst [vmem:[%s441] sm:$0xff] %v434
    %443 = vst [vmem:[%s441 + $0x8] sm:$0xff] %v435
    %444 = vst [vmem:[%s441 + $0x10] sm:$0xff] %v436
    %445 = vst [vmem:[%s441 + $0x18] sm:$0xff] %v437
    %446 = vst [vmem:[%s441 + $0x20] sm:$0xff] %v438
    %447 = vst [vmem:[%s441 + $0x28] sm:$0xff] %v439
    %448 = vst [vmem:[%s441 + $0x30] sm:$0xff] %v440
    %v449 = vld [vmem:[%s2] sm:$0xff]
    %v450 = vld [vmem:[%s2 + $0x8] sm:$0xff]
    %v451 = vld [vmem:[%s2 + $0x10] sm:$0xff]
    %v452 = vld [vmem:[%s2 + $0x18] sm:$0xff]
    %v453 = vld [vmem:[%s2 + $0x20] sm:$0xff]
    %v454 = vld [vmem:[%s2 + $0x28] sm:$0xff]
    %v455 = vld [vmem:[%s2 + $0x30] sm:$0xff]
    %456 = vrot.lane.b32.xlu0 %v449, 127
    %v457 = vpop.permute.xlu0 %456
    %458 = vrot.lane.b32.xlu0 %v450, 127
    %v459 = vpop.permute.xlu0 %458
    %460 = vrot.lane.b32.xlu0 %v451, 127
    %v461 = vpop.permute.xlu0 %460
    %462 = vrot.lane.b32.xlu0 %v452, 127
    %v463 = vpop.permute.xlu0 %462
    %464 = vrot.lane.b32.xlu0 %v453, 127
    %v465 = vpop.permute.xlu0 %464
    %466 = vrot.lane.b32.xlu0 %v454, 127
    %v467 = vpop.permute.xlu0 %466
    %468 = vrot.lane.b32.xlu0 %v455, 127
    %v469 = vpop.permute.xlu0 %468
    %vm470 = vcmp.lt.s32.totalorder %v73, 127
    %v471 = vsel %vm470, %v467, %v469
    %v472 = vsel %vm470, %v465, %v467
    %v473 = vsel %vm470, %v463, %v465
    %v474 = vsel %vm470, %v461, %v463
    %v475 = vsel %vm470, %v459, %v461
    %v476 = vsel %vm470, %v457, %v459
    %v477 = vsel %vm470, %v469, %v457
    %s478 = scalar_lea.vmem %s3, 5
    %v479 = vld [vmem:[%s478] ss:$8 sm:$0xf]
    %v480 = vld [vmem:[%s478] ss:$8 sm:$0xf0]
    %v481 = vor.u32 %v479, %v480
    %v483 = vlaneseq
    %v484 = vshrl.u32 %v483, 7
    %v485 = vsub.s32 0, %v484
    %v486 = vrot.slane %v481, %v485
    %v487 = vlaneseq
    %v488 = vshrl.u32 %v487, 7
    %v489 = vsub.s32 1, %v488
    %v490 = vrot.slane %v481, %v489
    %v491 = vlaneseq
    %v492 = vshrl.u32 %v491, 7
    %v493 = vsub.s32 2, %v492
    %v494 = vrot.slane %v481, %v493
    %v495 = vlaneseq
    %v496 = vshrl.u32 %v495, 7
    %v497 = vsub.s32 3, %v496
    %v498 = vrot.slane %v481, %v497
    %v499 = vlaneseq
    %v500 = vshrl.u32 %v499, 7
    %v501 = vsub.s32 4, %v500
    %v502 = vrot.slane %v481, %v501
    %v503 = vlaneseq
    %v504 = vshrl.u32 %v503, 7
    %v505 = vsub.s32 5, %v504
    %v506 = vrot.slane %v481, %v505
    %v507 = vlaneseq
    %v508 = vshrl.u32 %v507, 7
    %v509 = vsub.s32 6, %v508
    %v510 = vrot.slane %v481, %v509
    %v518 = vmul.f32 %v476, %v486
    %v519 = vmul.f32 %v475, %v490
    %v520 = vmul.f32 %v474, %v494
    %v521 = vmul.f32 %v473, %v498
    %v522 = vmul.f32 %v472, %v502
    %v523 = vmul.f32 %v471, %v506
    %v524 = vmul.f32 %v477, %v510
    %s525 = scalar_lea.vmem [#allocation2], 280
    %526 = vst [vmem:[%s525] sm:$0xff] %v518
    %527 = vst [vmem:[%s525 + $0x8] sm:$0xff] %v519
    %528 = vst [vmem:[%s525 + $0x10] sm:$0xff] %v520
    %529 = vst [vmem:[%s525 + $0x18] sm:$0xff] %v521
    %530 = vst [vmem:[%s525 + $0x20] sm:$0xff] %v522
    %531 = vst [vmem:[%s525 + $0x28] sm:$0xff] %v523
    %532 = vst [vmem:[%s525 + $0x30] sm:$0xff] %v524
    %v533 = vld [vmem:[%s2] sm:$0xff]
    %v534 = vld [vmem:[%s2 + $0x8] sm:$0xff]
    %v535 = vld [vmem:[%s2 + $0x10] sm:$0xff]
    %v536 = vld [vmem:[%s2 + $0x18] sm:$0xff]
    %v537 = vld [vmem:[%s2 + $0x20] sm:$0xff]
    %v538 = vld [vmem:[%s2 + $0x28] sm:$0xff]
    %v539 = vld [vmem:[%s2 + $0x30] sm:$0xff]
    %540 = vrot.lane.b32.xlu0 %v533, 101
    %v541 = vpop.permute.xlu0 %540
    %542 = vrot.lane.b32.xlu0 %v534, 101
    %v543 = vpop.permute.xlu0 %542
    %544 = vrot.lane.b32.xlu0 %v535, 101
    %v545 = vpop.permute.xlu0 %544
    %546 = vrot.lane.b32.xlu0 %v536, 101
    %v547 = vpop.permute.xlu0 %546
    %548 = vrot.lane.b32.xlu0 %v537, 101
    %v549 = vpop.permute.xlu0 %548
    %550 = vrot.lane.b32.xlu0 %v538, 101
    %v551 = vpop.permute.xlu0 %550
    %552 = vrot.lane.b32.xlu0 %v539, 101
    %v553 = vpop.permute.xlu0 %552
    %vm554 = vcmp.lt.s32.totalorder %v73, 101
    %v555 = vsel %vm554, %v551, %v553
    %v556 = vsel %vm554, %v549, %v551
    %v557 = vsel %vm554, %v547, %v549
    %v558 = vsel %vm554, %v545, %v547
    %v559 = vsel %vm554, %v543, %v545
    %v560 = vsel %vm554, %v541, %v543
    %v561 = vsel %vm554, %v553, %v541
    %s562 = scalar_lea.vmem %s3, 6
    %v563 = vld [vmem:[%s562] ss:$8 sm:$0xf]
    %v564 = vld [vmem:[%s562] ss:$8 sm:$0xf0]
    %v565 = vor.u32 %v563, %v564
    %v567 = vlaneseq
    %v568 = vshrl.u32 %v567, 7
    %v569 = vsub.s32 0, %v568
    %v570 = vrot.slane %v565, %v569
    %v571 = vlaneseq
    %v572 = vshrl.u32 %v571, 7
    %v573 = vsub.s32 1, %v572
    %v574 = vrot.slane %v565, %v573
    %v575 = vlaneseq
    %v576 = vshrl.u32 %v575, 7
    %v577 = vsub.s32 2, %v576
    %v578 = vrot.slane %v565, %v577
    %v579 = vlaneseq
    %v580 = vshrl.u32 %v579, 7
    %v581 = vsub.s32 3, %v580
    %v582 = vrot.slane %v565, %v581
    %v583 = vlaneseq
    %v584 = vshrl.u32 %v583, 7
    %v585 = vsub.s32 4, %v584
    %v586 = vrot.slane %v565, %v585
    %v587 = vlaneseq
    %v588 = vshrl.u32 %v587, 7
    %v589 = vsub.s32 5, %v588
    %v590 = vrot.slane %v565, %v589
    %v591 = vlaneseq
    %v592 = vshrl.u32 %v591, 7
    %v593 = vsub.s32 6, %v592
    %v594 = vrot.slane %v565, %v593
    %v602 = vmul.f32 %v560, %v570
    %v603 = vmul.f32 %v559, %v574
    %v604 = vmul.f32 %v558, %v578
    %v605 = vmul.f32 %v557, %v582
    %v606 = vmul.f32 %v556, %v586
    %v607 = vmul.f32 %v555, %v590
    %v608 = vmul.f32 %v561, %v594
    %s609 = scalar_lea.vmem [#allocation2], 336
    %610 = vst [vmem:[%s609] sm:$0xff] %v602
    %611 = vst [vmem:[%s609 + $0x8] sm:$0xff] %v603
    %612 = vst [vmem:[%s609 + $0x10] sm:$0xff] %v604
    %613 = vst [vmem:[%s609 + $0x18] sm:$0xff] %v605
    %614 = vst [vmem:[%s609 + $0x20] sm:$0xff] %v606
    %615 = vst [vmem:[%s609 + $0x28] sm:$0xff] %v607
    %616 = vst [vmem:[%s609 + $0x30] sm:$0xff] %v608
    %v617 = vld [vmem:[%s2] sm:$0xff]
    %v618 = vld [vmem:[%s2 + $0x8] sm:$0xff]
    %v619 = vld [vmem:[%s2 + $0x10] sm:$0xff]
    %v620 = vld [vmem:[%s2 + $0x18] sm:$0xff]
    %v621 = vld [vmem:[%s2 + $0x20] sm:$0xff]
    %v622 = vld [vmem:[%s2 + $0x28] sm:$0xff]
    %v623 = vld [vmem:[%s2 + $0x30] sm:$0xff]
    %624 = vrot.lane.b32.xlu0 %v617, 100
    %v625 = vpop.permute.xlu0 %624
    %626 = vrot.lane.b32.xlu0 %v618, 100
    %v627 = vpop.permute.xlu0 %626
    %628 = vrot.lane.b32.xlu0 %v619, 100
    %v629 = vpop.permute.xlu0 %628
    %630 = vrot.lane.b32.xlu0 %v620, 100
    %v631 = vpop.permute.xlu0 %630
    %632 = vrot.lane.b32.xlu0 %v621, 100
    %v633 = vpop.permute.xlu0 %632
    %634 = vrot.lane.b32.xlu0 %v622, 100
    %v635 = vpop.permute.xlu0 %634
    %636 = vrot.lane.b32.xlu0 %v623, 100
    %v637 = vpop.permute.xlu0 %636
    %vm638 = vcmp.lt.s32.totalorder %v73, 100
    %v639 = vsel %vm638, %v635, %v637
    %v640 = vsel %vm638, %v633, %v635
    %v641 = vsel %vm638, %v631, %v633
    %v642 = vsel %vm638, %v629, %v631
    %v643 = vsel %vm638, %v627, %v629
    %v644 = vsel %vm638, %v625, %v627
    %v645 = vsel %vm638, %v637, %v625
    %s646 = scalar_lea.vmem %s3, 7
    %v647 = vld [vmem:[%s646] ss:$8 sm:$0xf]
    %v648 = vld [vmem:[%s646] ss:$8 sm:$0xf0]
    %v649 = vor.u32 %v647, %v648
    %v651 = vlaneseq
    %v652 = vshrl.u32 %v651, 7
    %v653 = vsub.s32 0, %v652
    %v654 = vrot.slane %v649, %v653
    %v655 = vlaneseq
    %v656 = vshrl.u32 %v655, 7
    %v657 = vsub.s32 1, %v656
    %v658 = vrot.slane %v649, %v657
    %v659 = vlaneseq
    %v660 = vshrl.u32 %v659, 7
    %v661 = vsub.s32 2, %v660
    %v662 = vrot.slane %v649, %v661
    %v663 = vlaneseq
    %v664 = vshrl.u32 %v663, 7
    %v665 = vsub.s32 3, %v664
    %v666 = vrot.slane %v649, %v665
    %v667 = vlaneseq
    %v668 = vshrl.u32 %v667, 7
    %v669 = vsub.s32 4, %v668
    %v670 = vrot.slane %v649, %v669
    %v671 = vlaneseq
    %v672 = vshrl.u32 %v671, 7
    %v673 = vsub.s32 5, %v672
    %v674 = vrot.slane %v649, %v673
    %v675 = vlaneseq
    %v676 = vshrl.u32 %v675, 7
    %v677 = vsub.s32 6, %v676
    %v678 = vrot.slane %v649, %v677
    %v686 = vmul.f32 %v644, %v654
    %v687 = vmul.f32 %v643, %v658
    %v688 = vmul.f32 %v642, %v662
    %v689 = vmul.f32 %v641, %v666
    %v690 = vmul.f32 %v640, %v670
    %v691 = vmul.f32 %v639, %v674
    %v692 = vmul.f32 %v645, %v678
    %s693 = scalar_lea.vmem [#allocation2], 392
    %694 = vst [vmem:[%s693] sm:$0xff] %v686
    %695 = vst [vmem:[%s693 + $0x8] sm:$0xff] %v687
    %696 = vst [vmem:[%s693 + $0x10] sm:$0xff] %v688
    %697 = vst [vmem:[%s693 + $0x18] sm:$0xff] %v689
    %698 = vst [vmem:[%s693 + $0x20] sm:$0xff] %v690
    %699 = vst [vmem:[%s693 + $0x28] sm:$0xff] %v691
    %700 = vst [vmem:[%s693 + $0x30] sm:$0xff] %v692
    %v701 = vld [vmem:[%s2] sm:$0xff]
    %v702 = vld [vmem:[%s2 + $0x8] sm:$0xff]
    %v703 = vld [vmem:[%s2 + $0x10] sm:$0xff]
    %v704 = vld [vmem:[%s2 + $0x18] sm:$0xff]
    %v705 = vld [vmem:[%s2 + $0x20] sm:$0xff]
    %v706 = vld [vmem:[%s2 + $0x28] sm:$0xff]
    %v707 = vld [vmem:[%s2 + $0x30] sm:$0xff]
    %708 = vrot.lane.b32.xlu0 %v701, 99
    %v709 = vpop.permute.xlu0 %708
    %710 = vrot.lane.b32.xlu0 %v702, 99
    %v711 = vpop.permute.xlu0 %710
    %712 = vrot.lane.b32.xlu0 %v703, 99
    %v713 = vpop.permute.xlu0 %712
    %714 = vrot.lane.b32.xlu0 %v704, 99
    %v715 = vpop.permute.xlu0 %714
    %716 = vrot.lane.b32.xlu0 %v705, 99
    %v717 = vpop.permute.xlu0 %716
    %718 = vrot.lane.b32.xlu0 %v706, 99
    %v719 = vpop.permute.xlu0 %718
    %720 = vrot.lane.b32.xlu0 %v707, 99
    %v721 = vpop.permute.xlu0 %720
    %vm722 = vcmp.lt.s32.totalorder %v73, 99
    %v723 = vsel %vm722, %v719, %v721
    %v724 = vsel %vm722, %v717, %v719
    %v725 = vsel %vm722, %v715, %v717
    %v726 = vsel %vm722, %v713, %v715
    %v727 = vsel %vm722, %v711, %v713
    %v728 = vsel %vm722, %v709, %v711
    %v729 = vsel %vm722, %v721, %v709
    %s730 = scalar_lea.vmem %s3, 56
    %v731 = vld [vmem:[%s730] ss:$8 sm:$0xf]
    %v732 = vld [vmem:[%s730] ss:$8 sm:$0xf0]
    %v733 = vor.u32 %v731, %v732
    %v735 = vlaneseq
    %v736 = vshrl.u32 %v735, 7
    %v737 = vsub.s32 0, %v736
    %v738 = vrot.slane %v733, %v737
    %v739 = vlaneseq
    %v740 = vshrl.u32 %v739, 7
    %v741 = vsub.s32 1, %v740
    %v742 = vrot.slane %v733, %v741
    %v743 = vlaneseq
    %v744 = vshrl.u32 %v743, 7
    %v745 = vsub.s32 2, %v744
    %v746 = vrot.slane %v733, %v745
    %v747 = vlaneseq
    %v748 = vshrl.u32 %v747, 7
    %v749 = vsub.s32 3, %v748
    %v750 = vrot.slane %v733, %v749
    %v751 = vlaneseq
    %v752 = vshrl.u32 %v751, 7
    %v753 = vsub.s32 4, %v752
    %v754 = vrot.slane %v733, %v753
    %v755 = vlaneseq
    %v756 = vshrl.u32 %v755, 7
    %v757 = vsub.s32 5, %v756
    %v758 = vrot.slane %v733, %v757
    %v759 = vlaneseq
    %v760 = vshrl.u32 %v759, 7
    %v761 = vsub.s32 6, %v760
    %v762 = vrot.slane %v733, %v761
    %v770 = vmul.f32 %v728, %v738
    %v771 = vmul.f32 %v727, %v742
    %v772 = vmul.f32 %v726, %v746
    %v773 = vmul.f32 %v725, %v750
    %v774 = vmul.f32 %v724, %v754
    %v775 = vmul.f32 %v723, %v758
    %v776 = vmul.f32 %v729, %v762
    %s777 = scalar_lea.vmem [#allocation2], 448
    %778 = vst [vmem:[%s777] sm:$0xff] %v770
    %779 = vst [vmem:[%s777 + $0x8] sm:$0xff] %v771
    %780 = vst [vmem:[%s777 + $0x10] sm:$0xff] %v772
    %781 = vst [vmem:[%s777 + $0x18] sm:$0xff] %v773
    %782 = vst [vmem:[%s777 + $0x20] sm:$0xff] %v774
    %783 = vst [vmem:[%s777 + $0x28] sm:$0xff] %v775
    %784 = vst [vmem:[%s777 + $0x30] sm:$0xff] %v776
    %v785 = vld [vmem:[%s5] sm:$0x1]
    %v787 = vlaneseq
    %v788 = vshrl.u32 %v787, 7
    %v789 = vsub.s32 0, %v788
    %v790 = vrot.slane %v785, %v789
    %792 = vst [vmem:[%s6] sm:$0xff] %v790
    loop: start=0, step=1, limit=16
    $region34: #{cnn_forward.1} parent=1 // loop_pre_header
      _
    $region35: #{cnn_forward.1} parent=1 // loop_header
      %s794 = sphi 0, %s798
      %p795 = scmp.ge.s32.totalorder %s794, 16
    $region36: #{cnn_forward.1} parent=1 // loop_header_branch
      %797 = sbr.rel (%p795) target = $region40
    $region37: #{cnn_forward.1} parent=1 // loop_body
      %s799 = smul.u32 %s794, 128
      %s800 = sld [smem:[#allocation3 + %s799]]
      %v801 = vld [vmem:[#allocation2] sm:$0xff]
      %v802 = vld [vmem:[#allocation2 + $0x8] sm:$0xff]
      %v803 = vld [vmem:[#allocation2 + $0x10] sm:$0xff]
      %v804 = vld [vmem:[#allocation2 + $0x18] sm:$0xff]
      %v805 = vld [vmem:[#allocation2 + $0x20] sm:$0xff]
      %v806 = vld [vmem:[#allocation2 + $0x28] sm:$0xff]
      %v807 = vld [vmem:[#allocation2 + $0x30] sm:$0xff]
      %v808 = vstv %s800
      %v809 = vmul.f32 %v808, %v801
      %v810 = vmul.f32 %v808, %v802
      %v811 = vmul.f32 %v808, %v803
      %v812 = vmul.f32 %v808, %v804
      %v813 = vmul.f32 %v808, %v805
      %v814 = vmul.f32 %v808, %v806
      %v815 = vmul.f32 %v808, %v807
      %s816 = sadd.s32 %s799, 1
      %s817 = sld [smem:[#allocation3 + %s816]]
      %v818 = vld [vmem:[%s211] sm:$0xff]
      %v819 = vld [vmem:[%s211 + $0x8] sm:$0xff]
      %v820 = vld [vmem:[%s211 + $0x10] sm:$0xff]
      %v821 = vld [vmem:[%s211 + $0x18] sm:$0xff]
      %v822 = vld [vmem:[%s211 + $0x20] sm:$0xff]
      %v823 = vld [vmem:[%s211 + $0x28] sm:$0xff]
      %v824 = vld [vmem:[%s211 + $0x30] sm:$0xff]
      %v825 = vstv %s817
      %v826 = vmul.f32 %v825, %v818
      %v827 = vmul.f32 %v825, %v819
      %v828 = vmul.f32 %v825, %v820
      %v829 = vmul.f32 %v825, %v821
      %v830 = vmul.f32 %v825, %v822
      %v831 = vmul.f32 %v825, %v823
      %v832 = vmul.f32 %v825, %v824
      %v833 = vadd.f32 %v809, %v826
      %v834 = vadd.f32 %v810, %v827
      %v835 = vadd.f32 %v811, %v828
      %v836 = vadd.f32 %v812, %v829
      %v837 = vadd.f32 %v813, %v830
      %v838 = vadd.f32 %v814, %v831
      %v839 = vadd.f32 %v815, %v832
      %s840 = sadd.s32 %s799, 2
      %s841 = sld [smem:[#allocation3 + %s840]]
      %v842 = vld [vmem:[%s295] sm:$0xff]
      %v843 = vld [vmem:[%s295 + $0x8] sm:$0xff]
      %v844 = vld [vmem:[%s295 + $0x10] sm:$0xff]
      %v845 = vld [vmem:[%s295 + $0x18] sm:$0xff]
      %v846 = vld [vmem:[%s295 + $0x20] sm:$0xff]
      %v847 = vld [vmem:[%s295 + $0x28] sm:$0xff]
      %v848 = vld [vmem:[%s295 + $0x30] sm:$0xff]
      %v849 = vstv %s841
      %v850 = vmul.f32 %v849, %v842
      %v851 = vmul.f32 %v849, %v843
      %v852 = vmul.f32 %v849, %v844
      %v853 = vmul.f32 %v849, %v845
      %v854 = vmul.f32 %v849, %v846
      %v855 = vmul.f32 %v849, %v847
      %v856 = vmul.f32 %v849, %v848
      %v857 = vadd.f32 %v833, %v850
      %v858 = vadd.f32 %v834, %v851
      %v859 = vadd.f32 %v835, %v852
      %v860 = vadd.f32 %v836, %v853
      %v861 = vadd.f32 %v837, %v854
      %v862 = vadd.f32 %v838, %v855
      %v863 = vadd.f32 %v839, %v856
      %s864 = sadd.s32 %s799, 3
      %s865 = sld [smem:[#allocation3 + %s864]]
      %v866 = vld [vmem:[%s379] sm:$0xff]
      %v867 = vld [vmem:[%s379 + $0x8] sm:$0xff]
      %v868 = vld [vmem:[%s379 + $0x10] sm:$0xff]
      %v869 = vld [vmem:[%s379 + $0x18] sm:$0xff]
      %v870 = vld [vmem:[%s379 + $0x20] sm:$0xff]
      %v871 = vld [vmem:[%s379 + $0x28] sm:$0xff]
      %v872 = vld [vmem:[%s379 + $0x30] sm:$0xff]
      %v873 = vstv %s865
      %v874 = vmul.f32 %v873, %v866
      %v875 = vmul.f32 %v873, %v867
      %v876 = vmul.f32 %v873, %v868
      %v877 = vmul.f32 %v873, %v869
      %v878 = vmul.f32 %v873, %v870
      %v879 = vmul.f32 %v873, %v871
      %v880 = vmul.f32 %v873, %v872
      %v881 = vadd.f32 %v857, %v874
      %v882 = vadd.f32 %v858, %v875
      %v883 = vadd.f32 %v859, %v876
      %v884 = vadd.f32 %v860, %v877
      %v885 = vadd.f32 %v861, %v878
      %v886 = vadd.f32 %v862, %v879
      %v887 = vadd.f32 %v863, %v880
      %s888 = sadd.s32 %s799, 4
      %s889 = sld [smem:[#allocation3 + %s888]]
      %v890 = vld [vmem:[%s441] sm:$0xff]
      %v891 = vld [vmem:[%s441 + $0x8] sm:$0xff]
      %v892 = vld [vmem:[%s441 + $0x10] sm:$0xff]
      %v893 = vld [vmem:[%s441 + $0x18] sm:$0xff]
      %v894 = vld [vmem:[%s441 + $0x20] sm:$0xff]
      %v895 = vld [vmem:[%s441 + $0x28] sm:$0xff]
      %v896 = vld [vmem:[%s441 + $0x30] sm:$0xff]
      %v897 = vstv %s889
      %v898 = vmul.f32 %v897, %v890
      %v899 = vmul.f32 %v897, %v891
      %v900 = vmul.f32 %v897, %v892
      %v901 = vmul.f32 %v897, %v893
      %v902 = vmul.f32 %v897, %v894
      %v903 = vmul.f32 %v897, %v895
      %v904 = vmul.f32 %v897, %v896
      %v905 = vadd.f32 %v881, %v898
      %v906 = vadd.f32 %v882, %v899
      %v907 = vadd.f32 %v883, %v900
      %v908 = vadd.f32 %v884, %v901
      %v909 = vadd.f32 %v885, %v902
      %v910 = vadd.f32 %v886, %v903
      %v911 = vadd.f32 %v887, %v904
      %s912 = sadd.s32 %s799, 5
      %s913 = sld [smem:[#allocation3 + %s912]]
      %v914 = vld [vmem:[%s525] sm:$0xff]
      %v915 = vld [vmem:[%s525 + $0x8] sm:$0xff]
      %v916 = vld [vmem:[%s525 + $0x10] sm:$0xff]
      %v917 = vld [vmem:[%s525 + $0x18] sm:$0xff]
      %v918 = vld [vmem:[%s525 + $0x20] sm:$0xff]
      %v919 = vld [vmem:[%s525 + $0x28] sm:$0xff]
      %v920 = vld [vmem:[%s525 + $0x30] sm:$0xff]
      %v921 = vstv %s913
      %v922 = vmul.f32 %v921, %v914
      %v923 = vmul.f32 %v921, %v915
      %v924 = vmul.f32 %v921, %v916
      %v925 = vmul.f32 %v921, %v917
      %v926 = vmul.f32 %v921, %v918
      %v927 = vmul.f32 %v921, %v919
      %v928 = vmul.f32 %v921, %v920
      %v929 = vadd.f32 %v905, %v922
      %v930 = vadd.f32 %v906, %v923
      %v931 = vadd.f32 %v907, %v924
      %v932 = vadd.f32 %v908, %v925
      %v933 = vadd.f32 %v909, %v926
      %v934 = vadd.f32 %v910, %v927
      %v935 = vadd.f32 %v911, %v928
      %s936 = sadd.s32 %s799, 6
      %s937 = sld [smem:[#allocation3 + %s936]]
      %v938 = vld [vmem:[%s609] sm:$0xff]
      %v939 = vld [vmem:[%s609 + $0x8] sm:$0xff]
      %v940 = vld [vmem:[%s609 + $0x10] sm:$0xff]
      %v941 = vld [vmem:[%s609 + $0x18] sm:$0xff]
      %v942 = vld [vmem:[%s609 + $0x20] sm:$0xff]
      %v943 = vld [vmem:[%s609 + $0x28] sm:$0xff]
      %v944 = vld [vmem:[%s609 + $0x30] sm:$0xff]
      %v945 = vstv %s937
      %v946 = vmul.f32 %v945, %v938
      %v947 = vmul.f32 %v945, %v939
      %v948 = vmul.f32 %v945, %v940
      %v949 = vmul.f32 %v945, %v941
      %v950 = vmul.f32 %v945, %v942
      %v951 = vmul.f32 %v945, %v943
      %v952 = vmul.f32 %v945, %v944
      %v953 = vadd.f32 %v929, %v946
      %v954 = vadd.f32 %v930, %v947
      %v955 = vadd.f32 %v931, %v948
      %v956 = vadd.f32 %v932, %v949
      %v957 = vadd.f32 %v933, %v950
      %v958 = vadd.f32 %v934, %v951
      %v959 = vadd.f32 %v935, %v952
      %s960 = sadd.s32 %s799, 7
      %s961 = sld [smem:[#allocation3 + %s960]]
      %v962 = vld [vmem:[%s693] sm:$0xff]
      %v963 = vld [vmem:[%s693 + $0x8] sm:$0xff]
      %v964 = vld [vmem:[%s693 + $0x10] sm:$0xff]
      %v965 = vld [vmem:[%s693 + $0x18] sm:$0xff]
      %v966 = vld [vmem:[%s693 + $0x20] sm:$0xff]
      %v967 = vld [vmem:[%s693 + $0x28] sm:$0xff]
      %v968 = vld [vmem:[%s693 + $0x30] sm:$0xff]
      %v969 = vstv %s961
      %v970 = vmul.f32 %v969, %v962
      %v971 = vmul.f32 %v969, %v963
      %v972 = vmul.f32 %v969, %v964
      %v973 = vmul.f32 %v969, %v965
      %v974 = vmul.f32 %v969, %v966
      %v975 = vmul.f32 %v969, %v967
      %v976 = vmul.f32 %v969, %v968
      %v977 = vadd.f32 %v953, %v970
      %v978 = vadd.f32 %v954, %v971
      %v979 = vadd.f32 %v955, %v972
      %v980 = vadd.f32 %v956, %v973
      %v981 = vadd.f32 %v957, %v974
      %v982 = vadd.f32 %v958, %v975
      %v983 = vadd.f32 %v959, %v976
      %s984 = sadd.s32 %s799, 8
      %s985 = sld [smem:[#allocation3 + %s984]]
      %v986 = vld [vmem:[%s777] sm:$0xff]
      %v987 = vld [vmem:[%s777 + $0x8] sm:$0xff]
      %v988 = vld [vmem:[%s777 + $0x10] sm:$0xff]
      %v989 = vld [vmem:[%s777 + $0x18] sm:$0xff]
      %v990 = vld [vmem:[%s777 + $0x20] sm:$0xff]
      %v991 = vld [vmem:[%s777 + $0x28] sm:$0xff]
      %v992 = vld [vmem:[%s777 + $0x30] sm:$0xff]
      %v993 = vstv %s985
      %v994 = vmul.f32 %v993, %v986
      %v995 = vmul.f32 %v993, %v987
      %v996 = vmul.f32 %v993, %v988
      %v997 = vmul.f32 %v993, %v989
      %v998 = vmul.f32 %v993, %v990
      %v999 = vmul.f32 %v993, %v991
      %v1000 = vmul.f32 %v993, %v992
      %v1001 = vadd.f32 %v977, %v994
      %v1002 = vadd.f32 %v978, %v995
      %v1003 = vadd.f32 %v979, %v996
      %v1004 = vadd.f32 %v980, %v997
      %v1005 = vadd.f32 %v981, %v998
      %v1006 = vadd.f32 %v982, %v999
      %v1007 = vadd.f32 %v983, %v1000
      %s1008 = sld [smem:[#allocation5 + %s794]]
      %v1009 = vstv %s1008
      %v1010 = vadd.f32 %v1001, %v1009
      %v1011 = vadd.f32 %v1002, %v1009
      %v1012 = vadd.f32 %v1003, %v1009
      %v1013 = vadd.f32 %v1004, %v1009
      %v1014 = vadd.f32 %v1005, %v1009
      %v1015 = vadd.f32 %v1006, %v1009
      %v1016 = vadd.f32 %v1007, %v1009
      %v1017 = vmax.f32 %v1010, 0.0
      %v1018 = vmax.f32 %v1011, 0.0
      %v1019 = vmax.f32 %v1012, 0.0
      %v1020 = vmax.f32 %v1013, 0.0
      %v1021 = vmax.f32 %v1014, 0.0
      %v1022 = vmax.f32 %v1015, 0.0
      %v1023 = vmax.f32 %v1016, 0.0
      %v1024 = vpack.c.bf16 %v1017, %v1017
      %v1025 = vpack.c.bf16 %v1018, %v1018
      %v1026 = vpack.c.bf16 %v1019, %v1019
      %v1027 = vpack.c.bf16 %v1020, %v1020
      %v1028 = vpack.c.bf16 %v1021, %v1021
      %v1029 = vpack.c.bf16 %v1022, %v1022
      %v1030 = vpack.c.bf16 %v1023, %v1023
      %v1031 = vld [vmem:[%s6] sm:$0xff]
      %s1032 = smul.u32 %s794, 112
      %s1033 = smul.addr %s1032, 4
      %s1034 = scalar_lea.vmem %s4, %s1033
      %v1035 = vld [vmem:[%s1034] sm:$0xf]
      %v1036 = vld [vmem:[%s1034 + $0x4] sm:$0xf]
      %v1037 = vld [vmem:[%s1034 + $0x8] sm:$0xf]
      %v1038 = vld [vmem:[%s1034 + $0xc] sm:$0xf]
      %v1039 = vld [vmem:[%s1034 + $0x10] sm:$0xf]
      %v1040 = vld [vmem:[%s1034 + $0x14] sm:$0xf]
      %v1041 = vld [vmem:[%s1034 + $0x18] sm:$0xf]
      %v1042 = vld [vmem:[%s1034 + $0x1c] sm:$0xf]
      %v1043 = vld [vmem:[%s1034 + $0x20] sm:$0xf]
      %v1044 = vld [vmem:[%s1034 + $0x24] sm:$0xf]
      %v1045 = vld [vmem:[%s1034 + $0x28] sm:$0xf]
      %v1046 = vld [vmem:[%s1034 + $0x2c] sm:$0xf]
      %v1047 = vld [vmem:[%s1034 + $0x30] sm:$0xf]
      %v1048 = vld [vmem:[%s1034 + $0x34] sm:$0xf]
      %v1049 = vld [vmem:[%s1034 + $0x38] sm:$0xf]
      %v1050 = vld [vmem:[%s1034 + $0x3c] sm:$0xf]
      %v1051 = vld [vmem:[%s1034 + $0x40] sm:$0xf]
      %v1052 = vld [vmem:[%s1034 + $0x44] sm:$0xf]
      %v1053 = vld [vmem:[%s1034 + $0x48] sm:$0xf]
      %v1054 = vld [vmem:[%s1034 + $0x4c] sm:$0xf]
      %v1055 = vld [vmem:[%s1034 + $0x50] sm:$0xf]
      %v1056 = vld [vmem:[%s1034 + $0x54] sm:$0xf]
      %v1057 = vld [vmem:[%s1034 + $0x58] sm:$0xf]
      %v1058 = vld [vmem:[%s1034 + $0x5c] sm:$0xf]
      %v1059 = vld [vmem:[%s1034 + $0x60] sm:$0xf]
      %v1060 = vld [vmem:[%s1034 + $0x64] sm:$0xf]
      %v1061 = vld [vmem:[%s1034 + $0x68] sm:$0xf]
      %v1062 = vld [vmem:[%s1034 + $0x6c] sm:$0xf]
      %v1063 = vld [vmem:[%s1034 + $0x70] sm:$0xf]
      %v1064 = vld [vmem:[%s1034 + $0x74] sm:$0xf]
      %v1065 = vld [vmem:[%s1034 + $0x78] sm:$0xf]
      %v1066 = vld [vmem:[%s1034 + $0x7c] sm:$0xf]
      %v1067 = vld [vmem:[%s1034 + $0x80] sm:$0xf]
      %v1068 = vld [vmem:[%s1034 + $0x84] sm:$0xf]
      %v1069 = vld [vmem:[%s1034 + $0x88] sm:$0xf]
      %v1070 = vld [vmem:[%s1034 + $0x8c] sm:$0xf]
      %v1071 = vld [vmem:[%s1034 + $0x90] sm:$0xf]
      %v1072 = vld [vmem:[%s1034 + $0x94] sm:$0xf]
      %v1073 = vld [vmem:[%s1034 + $0x98] sm:$0xf]
      %v1074 = vld [vmem:[%s1034 + $0x9c] sm:$0xf]
      %v1075 = vld [vmem:[%s1034 + $0xa0] sm:$0xf]
      %v1076 = vld [vmem:[%s1034 + $0xa4] sm:$0xf]
      %v1077 = vld [vmem:[%s1034 + $0xa8] sm:$0xf]
      %v1078 = vld [vmem:[%s1034 + $0xac] sm:$0xf]
      %v1079 = vld [vmem:[%s1034 + $0xb0] sm:$0xf]
      %v1080 = vld [vmem:[%s1034 + $0xb4] sm:$0xf]
      %v1081 = vld [vmem:[%s1034 + $0xb8] sm:$0xf]
      %v1082 = vld [vmem:[%s1034 + $0xbc] sm:$0xf]
      %v1083 = vld [vmem:[%s1034 + $0xc0] sm:$0xf]
      %v1084 = vld [vmem:[%s1034 + $0xc4] sm:$0xf]
      %v1085 = vld [vmem:[%s1034 + $0xc8] sm:$0xf]
      %v1086 = vld [vmem:[%s1034 + $0xcc] sm:$0xf]
      %v1087 = vld [vmem:[%s1034 + $0xd0] sm:$0xf]
      %v1088 = vld [vmem:[%s1034 + $0xd4] sm:$0xf]
      %v1089 = vld [vmem:[%s1034 + $0xd8] sm:$0xf]
      %v1090 = vld [vmem:[%s1034 + $0xdc] sm:$0xf]
      %v1091 = vld [vmem:[%s1034 + $0xe0] sm:$0xf]
      %v1092 = vld [vmem:[%s1034 + $0xe4] sm:$0xf]
      %v1093 = vld [vmem:[%s1034 + $0xe8] sm:$0xf]
      %v1094 = vld [vmem:[%s1034 + $0xec] sm:$0xf]
      %v1095 = vld [vmem:[%s1034 + $0xf0] sm:$0xf]
      %v1096 = vld [vmem:[%s1034 + $0xf4] sm:$0xf]
      %v1097 = vld [vmem:[%s1034 + $0xf8] sm:$0xf]
      %v1098 = vld [vmem:[%s1034 + $0xfc] sm:$0xf]
      %v1099 = vld [vmem:[%s1034 + $0x100] sm:$0xf]
      %v1100 = vld [vmem:[%s1034 + $0x104] sm:$0xf]
      %v1101 = vld [vmem:[%s1034 + $0x108] sm:$0xf]
      %v1102 = vld [vmem:[%s1034 + $0x10c] sm:$0xf]
      %v1103 = vld [vmem:[%s1034 + $0x110] sm:$0xf]
      %v1104 = vld [vmem:[%s1034 + $0x114] sm:$0xf]
      %v1105 = vld [vmem:[%s1034 + $0x118] sm:$0xf]
      %v1106 = vld [vmem:[%s1034 + $0x11c] sm:$0xf]
      %v1107 = vld [vmem:[%s1034 + $0x120] sm:$0xf]
      %v1108 = vld [vmem:[%s1034 + $0x124] sm:$0xf]
      %v1109 = vld [vmem:[%s1034 + $0x128] sm:$0xf]
      %v1110 = vld [vmem:[%s1034 + $0x12c] sm:$0xf]
      %v1111 = vld [vmem:[%s1034 + $0x130] sm:$0xf]
      %v1112 = vld [vmem:[%s1034 + $0x134] sm:$0xf]
      %v1113 = vld [vmem:[%s1034 + $0x138] sm:$0xf]
      %v1114 = vld [vmem:[%s1034 + $0x13c] sm:$0xf]
      %v1115 = vld [vmem:[%s1034 + $0x140] sm:$0xf]
      %v1116 = vld [vmem:[%s1034 + $0x144] sm:$0xf]
      %v1117 = vld [vmem:[%s1034 + $0x148] sm:$0xf]
      %v1118 = vld [vmem:[%s1034 + $0x14c] sm:$0xf]
      %v1119 = vld [vmem:[%s1034 + $0x150] sm:$0xf]
      %v1120 = vld [vmem:[%s1034 + $0x154] sm:$0xf]
      %v1121 = vld [vmem:[%s1034 + $0x158] sm:$0xf]
      %v1122 = vld [vmem:[%s1034 + $0x15c] sm:$0xf]
      %v1123 = vld [vmem:[%s1034 + $0x160] sm:$0xf]
      %v1124 = vld [vmem:[%s1034 + $0x164] sm:$0xf]
      %v1125 = vld [vmem:[%s1034 + $0x168] sm:$0xf]
      %v1126 = vld [vmem:[%s1034 + $0x16c] sm:$0xf]
      %v1127 = vld [vmem:[%s1034 + $0x170] sm:$0xf]
      %v1128 = vld [vmem:[%s1034 + $0x174] sm:$0xf]
      %v1129 = vld [vmem:[%s1034 + $0x178] sm:$0xf]
      %v1130 = vld [vmem:[%s1034 + $0x17c] sm:$0xf]
      %v1131 = vld [vmem:[%s1034 + $0x180] sm:$0xf]
      %v1132 = vld [vmem:[%s1034 + $0x184] sm:$0xf]
      %v1133 = vld [vmem:[%s1034 + $0x188] sm:$0xf]
      %v1134 = vld [vmem:[%s1034 + $0x18c] sm:$0xf]
      %v1135 = vld [vmem:[%s1034 + $0x190] sm:$0xf]
      %v1136 = vld [vmem:[%s1034 + $0x194] sm:$0xf]
      %v1137 = vld [vmem:[%s1034 + $0x198] sm:$0xf]
      %v1138 = vld [vmem:[%s1034 + $0x19c] sm:$0xf]
      %v1139 = vld [vmem:[%s1034 + $0x1a0] sm:$0xf]
      %v1140 = vld [vmem:[%s1034 + $0x1a4] sm:$0xf]
      %v1141 = vld [vmem:[%s1034 + $0x1a8] sm:$0xf]
      %v1142 = vld [vmem:[%s1034 + $0x1ac] sm:$0xf]
      %v1143 = vld [vmem:[%s1034 + $0x1b0] sm:$0xf]
      %v1144 = vld [vmem:[%s1034 + $0x1b4] sm:$0xf]
      %v1145 = vld [vmem:[%s1034 + $0x1b8] sm:$0xf]
      %v1146 = vld [vmem:[%s1034 + $0x1bc] sm:$0xf]
      %v1259 = vunpack.c.l.b16 %v1035
      %v1260 = vunpack.c.l.b16 %v1036
      %v1261 = vunpack.c.l.b16 %v1037
      %v1262 = vunpack.c.l.b16 %v1038
      %v1263 = vunpack.c.l.b16 %v1039
      %v1264 = vunpack.c.l.b16 %v1040
      %v1265 = vunpack.c.l.b16 %v1041
      %v1266 = vunpack.c.l.b16 %v1042
      %v1267 = vunpack.c.l.b16 %v1043
      %v1268 = vunpack.c.l.b16 %v1044
      %v1269 = vunpack.c.l.b16 %v1045
      %v1270 = vunpack.c.l.b16 %v1046
      %v1271 = vunpack.c.l.b16 %v1047
      %v1272 = vunpack.c.l.b16 %v1048
      %v1273 = vunpack.c.l.b16 %v1049
      %v1274 = vunpack.c.l.b16 %v1050
      %v1275 = vunpack.c.l.b16 %v1051
      %v1276 = vunpack.c.l.b16 %v1052
      %v1277 = vunpack.c.l.b16 %v1053
      %v1278 = vunpack.c.l.b16 %v1054
      %v1279 = vunpack.c.l.b16 %v1055
      %v1280 = vunpack.c.l.b16 %v1056
      %v1281 = vunpack.c.l.b16 %v1057
      %v1282 = vunpack.c.l.b16 %v1058
      %v1283 = vunpack.c.l.b16 %v1059
      %v1284 = vunpack.c.l.b16 %v1060
      %v1285 = vunpack.c.l.b16 %v1061
      %v1286 = vunpack.c.l.b16 %v1062
      %v1287 = vunpack.c.l.b16 %v1063
      %v1288 = vunpack.c.l.b16 %v1064
      %v1289 = vunpack.c.l.b16 %v1065
      %v1290 = vunpack.c.l.b16 %v1066
      %v1291 = vunpack.c.l.b16 %v1067
      %v1292 = vunpack.c.l.b16 %v1068
      %v1293 = vunpack.c.l.b16 %v1069
      %v1294 = vunpack.c.l.b16 %v1070
      %v1295 = vunpack.c.l.b16 %v1071
      %v1296 = vunpack.c.l.b16 %v1072
      %v1297 = vunpack.c.l.b16 %v1073
      %v1298 = vunpack.c.l.b16 %v1074
      %v1299 = vunpack.c.l.b16 %v1075
      %v1300 = vunpack.c.l.b16 %v1076
      %v1301 = vunpack.c.l.b16 %v1077
      %v1302 = vunpack.c.l.b16 %v1078
      %v1303 = vunpack.c.l.b16 %v1079
      %v1304 = vunpack.c.l.b16 %v1080
      %v1305 = vunpack.c.l.b16 %v1081
      %v1306 = vunpack.c.l.b16 %v1082
      %v1307 = vunpack.c.l.b16 %v1083
      %v1308 = vunpack.c.l.b16 %v1084
      %v1309 = vunpack.c.l.b16 %v1085
      %v1310 = vunpack.c.l.b16 %v1086
      %v1311 = vunpack.c.l.b16 %v1087
      %v1312 = vunpack.c.l.b16 %v1088
      %v1313 = vunpack.c.l.b16 %v1089
      %v1314 = vunpack.c.l.b16 %v1090
      %v1315 = vunpack.c.l.b16 %v1091
      %v1316 = vunpack.c.l.b16 %v1092
      %v1317 = vunpack.c.l.b16 %v1093
      %v1318 = vunpack.c.l.b16 %v1094
      %v1319 = vunpack.c.l.b16 %v1095
      %v1320 = vunpack.c.l.b16 %v1096
      %v1321 = vunpack.c.l.b16 %v1097
      %v1322 = vunpack.c.l.b16 %v1098
      %v1323 = vunpack.c.l.b16 %v1099
      %v1324 = vunpack.c.l.b16 %v1100
      %v1325 = vunpack.c.l.b16 %v1101
      %v1326 = vunpack.c.l.b16 %v1102
      %v1327 = vunpack.c.l.b16 %v1103
      %v1328 = vunpack.c.l.b16 %v1104
      %v1329 = vunpack.c.l.b16 %v1105
      %v1330 = vunpack.c.l.b16 %v1106
      %v1331 = vunpack.c.l.b16 %v1107
      %v1332 = vunpack.c.l.b16 %v1108
      %v1333 = vunpack.c.l.b16 %v1109
      %v1334 = vunpack.c.l.b16 %v1110
      %v1335 = vunpack.c.l.b16 %v1111
      %v1336 = vunpack.c.l.b16 %v1112
      %v1337 = vunpack.c.l.b16 %v1113
      %v1338 = vunpack.c.l.b16 %v1114
      %v1339 = vunpack.c.l.b16 %v1115
      %v1340 = vunpack.c.l.b16 %v1116
      %v1341 = vunpack.c.l.b16 %v1117
      %v1342 = vunpack.c.l.b16 %v1118
      %v1343 = vunpack.c.l.b16 %v1119
      %v1344 = vunpack.c.l.b16 %v1120
      %v1345 = vunpack.c.l.b16 %v1121
      %v1346 = vunpack.c.l.b16 %v1122
      %v1347 = vunpack.c.l.b16 %v1123
      %v1348 = vunpack.c.l.b16 %v1124
      %v1349 = vunpack.c.l.b16 %v1125
      %v1350 = vunpack.c.l.b16 %v1126
      %v1351 = vunpack.c.l.b16 %v1127
      %v1352 = vunpack.c.l.b16 %v1128
      %v1353 = vunpack.c.l.b16 %v1129
      %v1354 = vunpack.c.l.b16 %v1130
      %v1355 = vunpack.c.l.b16 %v1131
      %v1356 = vunpack.c.l.b16 %v1132
      %v1357 = vunpack.c.l.b16 %v1133
      %v1358 = vunpack.c.l.b16 %v1134
      %v1359 = vunpack.c.l.b16 %v1135
      %v1360 = vunpack.c.l.b16 %v1136
      %v1361 = vunpack.c.l.b16 %v1137
      %v1362 = vunpack.c.l.b16 %v1138
      %v1363 = vunpack.c.l.b16 %v1139
      %v1364 = vunpack.c.l.b16 %v1140
      %v1365 = vunpack.c.l.b16 %v1141
      %v1366 = vunpack.c.l.b16 %v1142
      %v1367 = vunpack.c.l.b16 %v1143
      %v1368 = vunpack.c.l.b16 %v1144
      %v1369 = vunpack.c.l.b16 %v1145
      %v1370 = vunpack.c.l.b16 %v1146
      %v1371 = vpack.c.b16 %v1260, %v1259
      %v1372 = vpack.c.b16 %v1262, %v1261
      %v1373 = vpack.c.b16 %v1264, %v1263
      %v1374 = vpack.c.b16 %v1266, %v1265
      %v1375 = vpack.c.b16 %v1268, %v1267
      %v1376 = vpack.c.b16 %v1270, %v1269
      %v1377 = vpack.c.b16 %v1272, %v1271
      %v1378 = vpack.c.b16 %v1274, %v1273
      %v1379 = vpack.c.b16 %v1276, %v1275
      %v1380 = vpack.c.b16 %v1278, %v1277
      %v1381 = vpack.c.b16 %v1280, %v1279
      %v1382 = vpack.c.b16 %v1282, %v1281
      %v1383 = vpack.c.b16 %v1284, %v1283
      %v1384 = vpack.c.b16 %v1286, %v1285
      %v1385 = vpack.c.b16 %v1288, %v1287
      %v1386 = vpack.c.b16 %v1290, %v1289
      %v1387 = vpack.c.b16 %v1292, %v1291
      %v1388 = vpack.c.b16 %v1294, %v1293
      %v1389 = vpack.c.b16 %v1296, %v1295
      %v1390 = vpack.c.b16 %v1298, %v1297
      %v1391 = vpack.c.b16 %v1300, %v1299
      %v1392 = vpack.c.b16 %v1302, %v1301
      %v1393 = vpack.c.b16 %v1304, %v1303
      %v1394 = vpack.c.b16 %v1306, %v1305
      %v1395 = vpack.c.b16 %v1308, %v1307
      %v1396 = vpack.c.b16 %v1310, %v1309
      %v1397 = vpack.c.b16 %v1312, %v1311
      %v1398 = vpack.c.b16 %v1314, %v1313
      %v1399 = vpack.c.b16 %v1316, %v1315
      %v1400 = vpack.c.b16 %v1318, %v1317
      %v1401 = vpack.c.b16 %v1320, %v1319
      %v1402 = vpack.c.b16 %v1322, %v1321
      %v1403 = vpack.c.b16 %v1324, %v1323
      %v1404 = vpack.c.b16 %v1326, %v1325
      %v1405 = vpack.c.b16 %v1328, %v1327
      %v1406 = vpack.c.b16 %v1330, %v1329
      %v1407 = vpack.c.b16 %v1332, %v1331
      %v1408 = vpack.c.b16 %v1334, %v1333
      %v1409 = vpack.c.b16 %v1336, %v1335
      %v1410 = vpack.c.b16 %v1338, %v1337
      %v1411 = vpack.c.b16 %v1340, %v1339
      %v1412 = vpack.c.b16 %v1342, %v1341
      %v1413 = vpack.c.b16 %v1344, %v1343
      %v1414 = vpack.c.b16 %v1346, %v1345
      %v1415 = vpack.c.b16 %v1348, %v1347
      %v1416 = vpack.c.b16 %v1350, %v1349
      %v1417 = vpack.c.b16 %v1352, %v1351
      %v1418 = vpack.c.b16 %v1354, %v1353
      %v1419 = vpack.c.b16 %v1356, %v1355
      %v1420 = vpack.c.b16 %v1358, %v1357
      %v1421 = vpack.c.b16 %v1360, %v1359
      %v1422 = vpack.c.b16 %v1362, %v1361
      %v1423 = vpack.c.b16 %v1364, %v1363
      %v1424 = vpack.c.b16 %v1366, %v1365
      %v1425 = vpack.c.b16 %v1368, %v1367
      %v1426 = vpack.c.b16 %v1370, %v1369
      %1483 = vmatprep.subr.bf16.mxu0 0
      %1484 = vmatpush1.bf16.msra.mxu0 %v1371
      %1485 = vmatprep.subr.bf16.mxu0 0
      %1486 = vmatpush1.bf16.msra.mxu0 %v1372
      %1487 = vmatprep.subr.bf16.mxu0 0
      %1488 = vmatpush1.bf16.msra.mxu0 %v1373
      %1489 = vmatprep.subr.bf16.mxu0 0
      %1490 = vmatpush1.bf16.msra.mxu0 %v1374
      %1491 = vmatprep.subr.bf16.mxu0 0
      %1492 = vmatpush1.bf16.msra.mxu0 %v1375
      %1493 = vmatprep.subr.bf16.mxu0 0
      %1494 = vmatpush1.bf16.msra.mxu0 %v1376
      %1495 = vmatprep.subr.bf16.mxu0 0
      %1496 = vmatpush1.bf16.msra.mxu0 %v1377
      %1497 = vmatprep.subr.bf16.mxu0 0
      %1498 = vmatpush1.bf16.msra.mxu0 %v1378
      %1499 = vmatprep.subr.bf16.mxu0 0
      %1500 = vmatpush1.bf16.msra.mxu0 %v1379
      %1501 = vmatprep.subr.bf16.mxu0 0
      %1502 = vmatpush1.bf16.msra.mxu0 %v1380
      %1503 = vmatprep.subr.bf16.mxu0 0
      %1504 = vmatpush1.bf16.msra.mxu0 %v1381
      %1505 = vmatprep.subr.bf16.mxu0 0
      %1506 = vmatpush1.bf16.msra.mxu0 %v1382
      %1507 = vmatprep.subr.bf16.mxu0 0
      %1508 = vmatpush1.bf16.msra.mxu0 %v1383
      %1509 = vmatprep.subr.bf16.mxu0 0
      %1510 = vmatpush1.bf16.msra.mxu0 %v1384
      %1511 = vmatprep.subr.bf16.mxu0 0
      %1512 = vmatpush1.bf16.msra.mxu0 %v1385
      %1513 = vmatprep.subr.bf16.mxu0 0
      %1514 = vmatpush1.bf16.msra.mxu0 %v1386
      %1515 = vmatprep.mubr.bf16.mxu0 %v1025
      %1516 = vmatmul.mubr.bf16.gmra.mrb[0].mxu0 %v1024
      %v1517 = vpop.f32.mrb[0].mxu0
      %v1518 = vadd.f32 0.0, %v1517
      %v1519 = vpop.f32.mrb[0].mxu0
      %v1520 = vpop.f32.mrb[0].mxu0
      %v1521 = vpop.f32.mrb[0].mxu0
      %1522 = vdwg.mxu0
      %1523 = vmatprep.subr.bf16.mxu0 0
      %1524 = vmatpush1.bf16.msra.mxu0 %v1387
      %1525 = vmatprep.subr.bf16.mxu0 0
      %1526 = vmatpush1.bf16.msra.mxu0 %v1388
      %1527 = vmatprep.subr.bf16.mxu0 0
      %1528 = vmatpush1.bf16.msra.mxu0 %v1389
      %1529 = vmatprep.subr.bf16.mxu0 0
      %1530 = vmatpush1.bf16.msra.mxu0 %v1390
      %1531 = vmatprep.subr.bf16.mxu0 0
      %1532 = vmatpush1.bf16.msra.mxu0 %v1391
      %1533 = vmatprep.subr.bf16.mxu0 0
      %1534 = vmatpush1.bf16.msra.mxu0 %v1392
      %1535 = vmatprep.subr.bf16.mxu0 0
      %1536 = vmatpush1.bf16.msra.mxu0 %v1393
      %1537 = vmatprep.subr.bf16.mxu0 0
      %1538 = vmatpush1.bf16.msra.mxu0 %v1394
      %1539 = vmatprep.subr.bf16.mxu0 0
      %1540 = vmatpush1.bf16.msra.mxu0 %v1395
      %1541 = vmatprep.subr.bf16.mxu0 0
      %1542 = vmatpush1.bf16.msra.mxu0 %v1396
      %1543 = vmatprep.subr.bf16.mxu0 0
      %1544 = vmatpush1.bf16.msra.mxu0 %v1397
      %1545 = vmatprep.subr.bf16.mxu0 0
      %1546 = vmatpush1.bf16.msra.mxu0 %v1398
      %1547 = vmatprep.subr.bf16.mxu0 0
      %1548 = vmatpush1.bf16.msra.mxu0 %v1399
      %1549 = vmatprep.subr.bf16.mxu0 0
      %1550 = vmatpush1.bf16.msra.mxu0 %v1400
      %1551 = vmatprep.subr.bf16.mxu0 0
      %1552 = vmatpush1.bf16.msra.mxu0 %v1401
      %1553 = vmatprep.subr.bf16.mxu0 0
      %1554 = vmatpush1.bf16.msra.mxu0 %v1402
      %1555 = vmatprep.mubr.bf16.mxu0 %v1027
      %1556 = vmatmul.mubr.bf16.gmra.mrb[0].mxu0 %v1026
      %v1557 = vpop.f32.mrb[0].mxu0
      %v1558 = vadd.f32 %v1518, %v1557
      %v1559 = vpop.f32.mrb[0].mxu0
      %v1560 = vpop.f32.mrb[0].mxu0
      %v1561 = vpop.f32.mrb[0].mxu0
      %1562 = vdwg.mxu0
      %1563 = vmatprep.subr.bf16.mxu0 0
      %1564 = vmatpush1.bf16.msra.mxu0 %v1403
      %1565 = vmatprep.subr.bf16.mxu0 0
      %1566 = vmatpush1.bf16.msra.mxu0 %v1404
      %1567 = vmatprep.subr.bf16.mxu0 0
      %1568 = vmatpush1.bf16.msra.mxu0 %v1405
      %1569 = vmatprep.subr.bf16.mxu0 0
      %1570 = vmatpush1.bf16.msra.mxu0 %v1406
      %1571 = vmatprep.subr.bf16.mxu0 0
      %1572 = vmatpush1.bf16.msra.mxu0 %v1407
      %1573 = vmatprep.subr.bf16.mxu0 0
      %1574 = vmatpush1.bf16.msra.mxu0 %v1408
      %1575 = vmatprep.subr.bf16.mxu0 0
      %1576 = vmatpush1.bf16.msra.mxu0 %v1409
      %1577 = vmatprep.subr.bf16.mxu0 0
      %1578 = vmatpush1.bf16.msra.mxu0 %v1410
      %1579 = vmatprep.subr.bf16.mxu0 0
      %1580 = vmatpush1.bf16.msra.mxu0 %v1411
      %1581 = vmatprep.subr.bf16.mxu0 0
      %1582 = vmatpush1.bf16.msra.mxu0 %v1412
      %1583 = vmatprep.subr.bf16.mxu0 0
      %1584 = vmatpush1.bf16.msra.mxu0 %v1413
      %1585 = vmatprep.subr.bf16.mxu0 0
      %1586 = vmatpush1.bf16.msra.mxu0 %v1414
      %1587 = vmatprep.subr.bf16.mxu0 0
      %1588 = vmatpush1.bf16.msra.mxu0 %v1415
      %1589 = vmatprep.subr.bf16.mxu0 0
      %1590 = vmatpush1.bf16.msra.mxu0 %v1416
      %1591 = vmatprep.subr.bf16.mxu0 0
      %1592 = vmatpush1.bf16.msra.mxu0 %v1417
      %1593 = vmatprep.subr.bf16.mxu0 0
      %1594 = vmatpush1.bf16.msra.mxu0 %v1418
      %1595 = vmatprep.mubr.bf16.mxu0 %v1029
      %1596 = vmatmul.mubr.bf16.gmra.mrb[0].mxu0 %v1028
      %v1597 = vpop.f32.mrb[0].mxu0
      %v1598 = vadd.f32 %v1558, %v1597
      %v1599 = vpop.f32.mrb[0].mxu0
      %v1600 = vpop.f32.mrb[0].mxu0
      %v1601 = vpop.f32.mrb[0].mxu0
      %1602 = vdwg.mxu0
      %1603 = vmatprep.subr.bf16.mxu0 0
      %1604 = vmatpush1.bf16.msra.mxu0 %v1419
      %1605 = vmatprep.subr.bf16.mxu0 0
      %1606 = vmatpush1.bf16.msra.mxu0 %v1420
      %1607 = vmatprep.subr.bf16.mxu0 0
      %1608 = vmatpush1.bf16.msra.mxu0 %v1421
      %1609 = vmatprep.subr.bf16.mxu0 0
      %1610 = vmatpush1.bf16.msra.mxu0 %v1422
      %1611 = vmatprep.subr.bf16.mxu0 0
      %1612 = vmatpush1.bf16.msra.mxu0 %v1423
      %1613 = vmatprep.subr.bf16.mxu0 0
      %1614 = vmatpush1.bf16.msra.mxu0 %v1424
      %1615 = vmatprep.subr.bf16.mxu0 0
      %1616 = vmatpush1.bf16.msra.mxu0 %v1425
      %1617 = vmatprep.subr.bf16.mxu0 0
      %1618 = vmatpush1.bf16.msra.mxu0 %v1426
      %1619 = vmatprep.subr.bf16.mxu0 0
      %1620 = vmatpush1.bf16.msra.mxu0 0
      %1621 = vmatprep.subr.bf16.mxu0 0
      %1622 = vmatpush1.bf16.msra.mxu0 0
      %1623 = vmatprep.subr.bf16.mxu0 0
      %1624 = vmatpush1.bf16.msra.mxu0 0
      %1625 = vmatprep.subr.bf16.mxu0 0
      %1626 = vmatpush1.bf16.msra.mxu0 0
      %1627 = vmatprep.subr.bf16.mxu0 0
      %1628 = vmatpush1.bf16.msra.mxu0 0
      %1629 = vmatprep.subr.bf16.mxu0 0
      %1630 = vmatpush1.bf16.msra.mxu0 0
      %1631 = vmatprep.subr.bf16.mxu0 0
      %1632 = vmatpush1.bf16.msra.mxu0 0
      %1633 = vmatprep.subr.bf16.mxu0 0
      %1634 = vmatpush1.bf16.msra.mxu0 0
      %1635 = vmatprep.mubr.bf16.mxu0 0
      %1636 = vmatmul.mubr.bf16.gmra.mrb[0].mxu0 %v1030
      %v1637 = vpop.f32.mrb[0].mxu0
      %v1638 = vadd.f32 %v1598, %v1637
      %v1639 = vpop.f32.mrb[0].mxu0
      %v1640 = vpop.f32.mrb[0].mxu0
      %v1641 = vpop.f32.mrb[0].mxu0
      %1642 = vdwg.mxu0
      %v1643 = vadd.f32 %v1031, %v1638
      %1644 = vst [vmem:[%s6] sm:$0xff] %v1643
    $region38: #{cnn_forward.1} parent=1 // loop_footer
      %s798 = sadd.s32 1, %s794
    $region39: #{cnn_forward.1} parent=1 // loop_footer_branch
      %793 = sbr.rel target = $region35
    $region40: #{cnn_forward.1} parent=1 // loop_exit
      _
    // Predicated region
    $region41: #{cnn_forward.1} parent=1 // pred_check
      _
    $region42: #{cnn_forward.1} parent=1 // pred_check_branch
      %1646 = sbr.rel (0) target = $region44
    $region43: #{cnn_forward.1} parent=1 // pred_region
      _
    $region44: #{cnn_forward.1} parent=1 // pred_fallthru
      _
    // Predicated region
    $region45: #{cnn_forward.1} parent=1 // pred_check
      _
    $region46: #{cnn_forward.1} parent=1 // pred_check_branch
      %1648 = sbr.rel (0) target = $region48
    $region47: #{cnn_forward.1} parent=1 // pred_region
      _
    $region48: #{cnn_forward.1} parent=1 // pred_fallthru
      _
    %1649 = vsyncpa [#allocation4], 1
    %1650 = vsyncpa [#allocation6], 1

</llo_original>
